<compile_context>
chip_gen: v5e
topology: v5e:2x2
jax: 0.10.0
libtpu: 0.0.40
codegen_flags: <defaults>
</compile_context>

<pallas_src>
import functools

import jax
import jax.numpy as jnp
from jax.experimental import pallas as pl
from jax.experimental.pallas import tpu as pltpu


def _round_up(x, m):
    return (x + m - 1) // m * m


def _bpn_kernel(st_ref, w1_ref, b1_ref, w2_ref, b2_ref, w3_ref, b3_ref,
                score_ref, *, p, use_bf16):
    """One batch tile.

    st_ref    : (2, TB, F) VMEM block; [0]=src rows, [1]=tgt rows.
    score_ref : (1, TB) lane-dense output holding ||net(src)-net(tgt)||_p.
    """
    _, tb, f = st_ref.shape

    # Free view: src and tgt rows are already contiguous along the batch axis,
    # so one fused (2*TB, F) MLP pass = 3 MXU matmul sequences per tile.
    x = st_ref[...].reshape(2 * tb, f)

    if use_bf16:
        def mm(a, w_ref):
            return jnp.dot(a.astype(jnp.bfloat16),
                           w_ref[...].astype(jnp.bfloat16),
                           preferred_element_type=jnp.float32)
    else:
        def mm(a, w_ref):
            return jnp.dot(a, w_ref[...], preferred_element_type=jnp.float32)

    h = jnp.maximum(mm(x, w1_ref) + b1_ref[...], 0.0)
    h = jnp.maximum(mm(h, w2_ref) + b2_ref[...], 0.0)
    o = mm(h, w3_ref) + b3_ref[...]                  # (2*TB, n_output)

    diff = o[:tb, :] - o[tb:, :]                     # (TB, n_output)

    # p-norm including the final root (EUP slot is otherwise idle here).
    if p == 2.0:
        score = jnp.sqrt(jnp.sum(diff * diff, axis=-1))
    elif p == 1.0:
        score = jnp.sum(jnp.abs(diff), axis=-1)
    else:
        score = jnp.power(jnp.sum(jnp.power(jnp.abs(diff), p), axis=-1), 1.0 / p)

    # Lane-dense store: (1, TB) full-width row instead of a masked (TB, 1) column.
    score_ref[...] = score.reshape(1, tb)


def _choose_tile_b(B, F):
    """VMEM-budget-aware batch tile; >=2 grid steps whenever B allows it."""
    if B < 256 or B % 128 != 0:
        return B                                     # small / odd batch: single tile

    f_pad = _round_up(F, 128)
    row_bytes = 2 * f_pad * 4                        # src+tgt row, f32, lane-padded
    budget = 8 * 1024 * 1024                         # per-buffer budget (safe on v5e/v6e/v7x)
    max_rows = max(128, (budget // (2 * row_bytes)) // 128 * 128)  # /2: double buffering

    # Multiples of 128 that divide B, capped at B//2 so the grid has >= 2 steps
    # (v7x dual-TC sharding; also keeps the pipeline alive on v5e/v6e).
    cands = [c for c in range(128, B // 2 + 1, 128)
             if B % c == 0 and c <= max_rows]
    if not cands:
        return 128
    big = [c for c in cands if c >= 256]             # amortize ~0.35us/grid-step overhead
    return max(big) if big else max(cands)


def bpn_forward(triples, params, *, distance_norm=2.0, tile_b=None, use_bf16=False):
    """Pallas implementation of BPNModel.forward.

    triples: (B, 3, F) float32
    returns (score: (B,), label: (B, F))
    """
    w1, b1, w2, b2, w3, b3 = params
    B, three, F = triples.shape
    assert three == 3
    H1 = w1.shape[1]
    H2 = w2.shape[1]
    O = w3.shape[1]

    # label is a plain passthrough slice; it never enters the kernel.
    label = triples[:, 2, :]
    # src/tgt presented contiguous: (2, B, F). One cheap XLA transpose that the
    # (overlappable) label slice shares its read with.
    src_tgt = jnp.transpose(triples[:, :2, :], (1, 0, 2))

    if tile_b is None:
        tile_b = _choose_tile_b(B, F)
    assert B % tile_b == 0
    num_tiles = B // tile_b
    if num_tiles > 1:
        # lane-dense (1, tile_b) score tiles must be 128-lane aligned
        assert tile_b % 128 == 0, "tile_b must be a multiple of 128 when tiling"

    # biases kept 2D (1, H) for TPU-friendly layouts.
    b1_2d = b1.reshape(1, H1)
    b2_2d = b2.reshape(1, H2)
    b3_2d = b3.reshape(1, O)

    # ---- VMEM footprint estimate (padded layouts) ----
    f_pad, h1_pad, h2_pad, o_pad = (_round_up(d, 128) for d in (F, H1, H2, O))
    in_bytes = 2 * (2 * tile_b * f_pad * 4)                       # (2,TB,F), double-buffered
    out_bytes = 2 * (8 * _round_up(tile_b, 128) * 4)              # (1,TB) row, sublane-padded
    w_bytes = (_round_up(F, 8) * h1_pad + _round_up(H1, 8) * h2_pad
               + _round_up(H2, 8) * o_pad) * 4
    bias_bytes = 8 * (h1_pad + h2_pad + o_pad) * 4
    weight_total = w_bytes + bias_bytes
    # Grid-invariant weights: single-buffer them only when it actually matters.
    single_buffer_weights = weight_total > (2 << 20)
    w_buf = 1 if single_buffer_weights else 2
    inter_bytes = 2 * tile_b * (h1_pad + h2_pad + o_pad) * 4      # activations in-flight
    est_bytes = in_bytes + out_bytes + w_buf * weight_total + inter_bytes
    vmem_limit = int(min(60 << 20, max(32 << 20, 2 * est_bytes)))

    def _const_spec(shape):
        if single_buffer_weights:
            return pl.BlockSpec(shape, lambda i: (0, 0), pipeline_mode=pl.Buffered(1))
        return pl.BlockSpec(shape, lambda i: (0, 0))

    p = float(distance_norm)
    kernel = functools.partial(_bpn_kernel, p=p, use_bf16=use_bf16)

    flops = 2 * (2 * B) * (F * H1 + H1 * H2 + H2 * O)
    bytes_accessed = 4 * (2 * B * F + w1.size + w2.size + w3.size
                          + b1.size + b2.size + b3.size + B)
    if p == 2.0:
        transcendentals = B                      # in-kernel sqrt
    elif p == 1.0:
        transcendentals = 0
    else:
        transcendentals = 2 * B * O + B          # pow(|diff|,p) + final root

    score = pl.pallas_call(
        kernel,
        out_shape=jax.ShapeDtypeStruct((1, B), jnp.float32),
        grid_spec=pltpu.PrefetchScalarGridSpec(
            num_scalar_prefetch=0,
            grid=(num_tiles,),
            in_specs=[
                pl.BlockSpec((2, tile_b, F), lambda i: (0, i, 0)),  # src/tgt tile
                _const_spec((F, H1)),                                # w1
                _const_spec((1, H1)),                                # b1
                _const_spec((H1, H2)),                               # w2
                _const_spec((1, H2)),                                # b2
                _const_spec((H2, O)),                                # w3
                _const_spec((1, O)),                                 # b3
            ],
            out_specs=pl.BlockSpec((1, tile_b), lambda i: (0, i)),
        ),
        compiler_params=pltpu.CompilerParams(
            dimension_semantics=("parallel",),
            vmem_limit_bytes=vmem_limit),
        cost_estimate=pl.CostEstimate(
            flops=flops,
            transcendentals=transcendentals,
            bytes_accessed=bytes_accessed),
    )(src_tgt, w1, b1_2d, w2, b2_2d, w3, b3_2d)

    return score.reshape(B), label


def init_params(key, n_feature, n_first_hidden, n_second_hidden, n_output):
    """Deterministic init matching torch.nn.Linear shapes (stored transposed: (in, out))."""
    ks = jax.random.split(key, 6)

    def lin(kw, kb, fan_in, fan_out):
        bound = 1.0 / jnp.sqrt(fan_in)
        w = jax.random.uniform(kw, (fan_in, fan_out), jnp.float32, -bound, bound)
        b = jax.random.uniform(kb, (fan_out,), jnp.float32, -bound, bound)
        return w, b

    w1, b1 = lin(ks[0], ks[1], n_feature, n_first_hidden)
    w2, b2 = lin(ks[2], ks[3], n_first_hidden, n_second_hidden)
    w3, b3 = lin(ks[4], ks[5], n_second_hidden, n_output)
    return (w1, b1, w2, b2, w3, b3)


def _reference_forward(triples, params, distance_norm):
    """Pure-JAX reference for verification (mirrors torch.norm semantics)."""
    w1, b1, w2, b2, w3, b3 = params
    src, tgt, label = triples[:, 0, :], triples[:, 1, :], triples[:, 2, :]

    def mlp(x):
        h = jnp.maximum(x @ w1 + b1, 0.0)
        h = jnp.maximum(h @ w2 + b2, 0.0)
        return h @ w3 + b3

    diff = mlp(src) - mlp(tgt)
    p = float(distance_norm)
    if p == 2.0:
        score = jnp.sqrt(jnp.sum(diff * diff, axis=1))
    elif p == 1.0:
        score = jnp.sum(jnp.abs(diff), axis=1)
    else:
        score = jnp.power(jnp.sum(jnp.power(jnp.abs(diff), p), axis=1), 1.0 / p)
    return score, label


if __name__ == "__main__":
    # Small but tiling-exercising shapes: grid of 2 tiles of 128 rows.
    B = 256
    n_feature = 32
    n_first_hidden = 64
    n_second_hidden = 64
    n_output = 16
    distance_norm = 2.0

    key = jax.random.PRNGKey(0)
    k_param, k_data = jax.random.split(key)

    params = init_params(k_param, n_feature, n_first_hidden, n_second_hidden, n_output)
    triples = jax.random.normal(k_data, (B, 3, n_feature), dtype=jnp.float32)

    score, label = bpn_forward(triples, params, distance_norm=distance_norm)
    score = jax.block_until_ready(score)
    label = jax.block_until_ready(label)

    ref_score, ref_label = _reference_forward(triples, params, distance_norm)
    assert score.shape == (B,)
    assert label.shape == (B, n_feature)
    assert jnp.allclose(score, ref_score, atol=1e-4, rtol=1e-4)
    assert jnp.allclose(label, ref_label)

    print("KERNEL_OK")
</pallas_src>

<mosaic_0001>
module attributes {stable_mosaic.version = 11 : i64} {
  func.func @_bpn_kernel(%arg0: i32, %arg1: memref<2x128x32xf32, #tpu.memory_space<vmem>>, %arg2: memref<32x64xf32, #tpu.memory_space<vmem>>, %arg3: memref<1x64xf32, #tpu.memory_space<vmem>>, %arg4: memref<64x64xf32, #tpu.memory_space<vmem>>, %arg5: memref<1x64xf32, #tpu.memory_space<vmem>>, %arg6: memref<64x16xf32, #tpu.memory_space<vmem>>, %arg7: memref<1x16xf32, #tpu.memory_space<vmem>>, %arg8: memref<1x128xf32, #tpu.memory_space<vmem>>) attributes {dimension_semantics = [#tpu.dimension_semantics<parallel>], iteration_bounds = array<i64: 2>, scalar_prefetch = 0 : i64, scratch_operands = 0 : i64, tpu.core_type = #tpu.core_type<tc>, window_params = [{transform_indices = @transform_0, window_bounds = array<i64: 2, 128, 32>}, {pipeline_mode = #tpu.pipeline_mode<synchronous>, transform_indices = @transform_1, window_bounds = array<i64: 32, 64>}, {pipeline_mode = #tpu.pipeline_mode<synchronous>, transform_indices = @transform_2, window_bounds = array<i64: 1, 64>}, {pipeline_mode = #tpu.pipeline_mode<synchronous>, transform_indices = @transform_3, window_bounds = array<i64: 64, 64>}, {pipeline_mode = #tpu.pipeline_mode<synchronous>, transform_indices = @transform_4, window_bounds = array<i64: 1, 64>}, {pipeline_mode = #tpu.pipeline_mode<synchronous>, transform_indices = @transform_5, window_bounds = array<i64: 64, 16>}, {pipeline_mode = #tpu.pipeline_mode<synchronous>, transform_indices = @transform_6, window_bounds = array<i64: 1, 16>}, {transform_indices = @transform_7, window_bounds = array<i64: 1, 128>}]} {
    %c0 = arith.constant 0 : index
    %c0_0 = arith.constant 0 : index
    %c0_1 = arith.constant 0 : index
    %0 = vector.load %arg1[%c0, %c0_0, %c0_1] : memref<2x128x32xf32, #tpu.memory_space<vmem>>, vector<2x128x32xf32>
    %1 = vector.shape_cast %0 : vector<2x128x32xf32> to vector<256x32xf32>
    %c0_2 = arith.constant 0 : index
    %c0_3 = arith.constant 0 : index
    %2 = vector.load %arg2[%c0_2, %c0_3] : memref<32x64xf32, #tpu.memory_space<vmem>>, vector<32x64xf32>
    %cst = arith.constant dense<0.000000e+00> : vector<256x64xf32>
    %3 = tpu.matmul %1, %2, %cst {dimension_numbers = #tpu.dot_dimension_numbers<[1], [0], [0], [1], [0, 0, 1, 1], [], []>} : vector<256x32xf32>, vector<32x64xf32>, vector<256x64xf32> -> vector<256x64xf32>
    %c0_4 = arith.constant 0 : index
    %c0_5 = arith.constant 0 : index
    %4 = vector.load %arg3[%c0_4, %c0_5] : memref<1x64xf32, #tpu.memory_space<vmem>>, vector<1x64xf32>
    %5 = vector.broadcast %4 : vector<1x64xf32> to vector<256x64xf32>
    %6 = arith.addf %3, %5 : vector<256x64xf32>
    %cst_6 = arith.constant 0.000000e+00 : f32
    %7 = vector.broadcast %cst_6 : f32 to vector<256x64xf32>
    %8 = arith.maximumf %6, %7 : vector<256x64xf32>
    %c0_7 = arith.constant 0 : index
    %c0_8 = arith.constant 0 : index
    %9 = vector.load %arg4[%c0_7, %c0_8] : memref<64x64xf32, #tpu.memory_space<vmem>>, vector<64x64xf32>
    %cst_9 = arith.constant dense<0.000000e+00> : vector<256x64xf32>
    %10 = tpu.matmul %8, %9, %cst_9 {dimension_numbers = #tpu.dot_dimension_numbers<[1], [0], [0], [1], [0, 0, 1, 1], [], []>} : vector<256x64xf32>, vector<64x64xf32>, vector<256x64xf32> -> vector<256x64xf32>
    %c0_10 = arith.constant 0 : index
    %c0_11 = arith.constant 0 : index
    %11 = vector.load %arg5[%c0_10, %c0_11] : memref<1x64xf32, #tpu.memory_space<vmem>>, vector<1x64xf32>
    %12 = vector.broadcast %11 : vector<1x64xf32> to vector<256x64xf32>
    %13 = arith.addf %10, %12 : vector<256x64xf32>
    %cst_12 = arith.constant 0.000000e+00 : f32
    %14 = vector.broadcast %cst_12 : f32 to vector<256x64xf32>
    %15 = arith.maximumf %13, %14 : vector<256x64xf32>
    %c0_13 = arith.constant 0 : index
    %c0_14 = arith.constant 0 : index
    %16 = vector.load %arg6[%c0_13, %c0_14] : memref<64x16xf32, #tpu.memory_space<vmem>>, vector<64x16xf32>
    %cst_15 = arith.constant dense<0.000000e+00> : vector<256x16xf32>
    %17 = tpu.matmul %15, %16, %cst_15 {dimension_numbers = #tpu.dot_dimension_numbers<[1], [0], [0], [1], [0, 0, 1, 1], [], []>} : vector<256x64xf32>, vector<64x16xf32>, vector<256x16xf32> -> vector<256x16xf32>
    %c0_16 = arith.constant 0 : index
    %c0_17 = arith.constant 0 : index
    %18 = vector.load %arg7[%c0_16, %c0_17] : memref<1x16xf32, #tpu.memory_space<vmem>>, vector<1x16xf32>
    %19 = vector.broadcast %18 : vector<1x16xf32> to vector<256x16xf32>
    %20 = arith.addf %17, %19 : vector<256x16xf32>
    %21 = vector.extract_strided_slice %20 {offsets = [0, 0], sizes = [128, 16], strides = [1, 1]} : vector<256x16xf32> to vector<128x16xf32>
    %22 = vector.extract_strided_slice %20 {offsets = [128, 0], sizes = [128, 16], strides = [1, 1]} : vector<256x16xf32> to vector<128x16xf32>
    %23 = arith.subf %21, %22 : vector<128x16xf32>
    %24 = arith.mulf %23, %23 : vector<128x16xf32>
    %cst_18 = arith.constant dense<0.000000e+00> : vector<128xf32>
    %25 = vector.multi_reduction <add>, %24, %cst_18 [1] : vector<128x16xf32> to vector<128xf32>
    %26 = math.sqrt %25 : vector<128xf32>
    %27 = vector.shape_cast %26 : vector<128xf32> to vector<1x128xf32>
    %c0_19 = arith.constant 0 : index
    %c0_20 = arith.constant 0 : index
    %28 = vector.load %arg8[%c0_19, %c0_20] : memref<1x128xf32, #tpu.memory_space<vmem>>, vector<1x128xf32>
    tpu.vector_store %arg8[%c0_19, %c0_20], %27 {strides = array<i32>} : memref<1x128xf32, #tpu.memory_space<vmem>>, vector<1x128xf32>,
    return
  }
  func.func @transform_0(%arg0: i32) -> (i32, i32, i32) {
    %c0_i32 = arith.constant 0 : i32
    %c0_i32_0 = arith.constant 0 : i32
    %c0_i32_1 = arith.constant 0 : i32
    return %c0_i32, %arg0, %c0_i32_0 : i32, i32, i32
  }
  func.func @transform_1(%arg0: i32) -> (i32, i32) {
    %c0_i32 = arith.constant 0 : i32
    %c0_i32_0 = arith.constant 0 : i32
    %c0_i32_1 = arith.constant 0 : i32
    return %c0_i32, %c0_i32_0 : i32, i32
  }
  func.func @transform_2(%arg0: i32) -> (i32, i32) {
    %c0_i32 = arith.constant 0 : i32
    %c0_i32_0 = arith.constant 0 : i32
    %c0_i32_1 = arith.constant 0 : i32
    return %c0_i32, %c0_i32_0 : i32, i32
  }
  func.func @transform_3(%arg0: i32) -> (i32, i32) {
    %c0_i32 = arith.constant 0 : i32
    %c0_i32_0 = arith.constant 0 : i32
    %c0_i32_1 = arith.constant 0 : i32
    return %c0_i32, %c0_i32_0 : i32, i32
  }
  func.func @transform_4(%arg0: i32) -> (i32, i32) {
    %c0_i32 = arith.constant 0 : i32
    %c0_i32_0 = arith.constant 0 : i32
    %c0_i32_1 = arith.constant 0 : i32
    return %c0_i32, %c0_i32_0 : i32, i32
  }
  func.func @transform_5(%arg0: i32) -> (i32, i32) {
    %c0_i32 = arith.constant 0 : i32
    %c0_i32_0 = arith.constant 0 : i32
    %c0_i32_1 = arith.constant 0 : i32
    return %c0_i32, %c0_i32_0 : i32, i32
  }
  func.func @transform_6(%arg0: i32) -> (i32, i32) {
    %c0_i32 = arith.constant 0 : i32
    %c0_i32_0 = arith.constant 0 : i32
    %c0_i32_1 = arith.constant 0 : i32
    return %c0_i32, %c0_i32_0 : i32, i32
  }
  func.func @transform_7(%arg0: i32) -> (i32, i32) {
    %c0_i32 = arith.constant 0 : i32
    %c0_i32_0 = arith.constant 0 : i32
    return %c0_i32, %arg0 : i32, i32
  }
}

</mosaic_0001>

<llo_original>
// kernel: tpu_custom_call.1
$region0: #{tpu_custom_call.1}
  #allocation0 [shape = 'u32[]', space=smem, size = 0x4, offset = 0x4, fixed_abs, tag = 'smem constant byte address 0x4 - core index']
  #allocation1 [shape = 'u32[72,128]{1,0:T(1,128)}', space=vmem, size = 0x9000, scoped, tag = 'internal scratch']
  %s0 = inlined_call_operand.vmem [shape: f32[2,256,32], index: 0, kind: input, shape index: {}]
  %s1 = inlined_call_operand.vmem [shape: f32[32,64], index: 1, kind: input, shape index: {}]
  %s2 = inlined_call_operand.vmem [shape: f32[1,64], index: 2, kind: input, shape index: {}]
  %s3 = inlined_call_operand.vmem [shape: f32[64,64], index: 3, kind: input, shape index: {}]
  %s4 = inlined_call_operand.vmem [shape: f32[1,64], index: 4, kind: input, shape index: {}]
  %s5 = inlined_call_operand.vmem [shape: f32[64,16], index: 5, kind: input, shape index: {}]
  %s6 = inlined_call_operand.vmem [shape: f32[1,16], index: 6, kind: input, shape index: {}]
  %s7 = inlined_call_operand.hbm [shape: f32[1,256], index: 7, kind: output, shape index: {}]
  %s8 = sld [smem:[#allocation0]]
  $region99: #{tpu_custom_call.1} parent=0
    _
  %s10 = ssub.s32 1, %s8
  %s11 = scalar_select 0, %s10, %s8
  $region1: #{tpu_custom_call.1} parent=0
    #allocation2 [shape = 'u8[262144]{0}', space=vmem, size = 0x40000, scoped, tag = 'input window, operand 0']
    #allocation3 [shape = 'u8[1024]{0}', space=vmem, size = 0x400, scoped, tag = 'output window, operand 0']
    #allocation4 [shape = 's32[2]{0}', space=sflag, size = 0x8, scoped, tag = 'scoped memory for tpu_custom_call.1']
    %12 = vsyncpa [#allocation4], 0
    %s13 = scalar_lea.sflag [#allocation4], 1
    %14 = vsyncpa %s13, 0
    loop: start=0, step=1, limit=4
    $region2: #{tpu_custom_call.1} parent=1 // loop_pre_header
      _
    $region3: #{tpu_custom_call.1} parent=1 // loop_header
      %s16 = sphi 0, %s20
      %p17 = scmp.ge.s32.totalorder %s16, 4
      %s26 = sphi 0, %s28
      %s29 = sphi 0, %s26
      %s30 = sphi 0, %s29
      %s46 = sphi 0, %s30
      %s50 = sphi 0, %s50
      %s52 = sphi 0, %s50
      %s53 = sphi 0, %s52
      %s67 = sphi 0, %s53
      %s71 = sphi 0, %s71
      %s73 = sphi 0, %s71
      %s74 = sphi 0, %s73
      %s88 = sphi 0, %s74
      %s92 = sphi 0, %s92
      %s94 = sphi 0, %s92
      %s95 = sphi 0, %s94
      %s109 = sphi 0, %s95
      %s113 = sphi 0, %s113
      %s115 = sphi 0, %s113
      %s116 = sphi 0, %s115
      %s130 = sphi 0, %s116
      %s134 = sphi 0, %s134
      %s136 = sphi 0, %s134
      %s137 = sphi 0, %s136
      %s151 = sphi 0, %s137
      %s155 = sphi 0, %s155
      %s157 = sphi 0, %s155
      %s158 = sphi 0, %s157
      %s172 = sphi 0, %s158
      %s178 = sphi 0, %s180
      %s181 = sphi 0, %s178
      %s182 = sphi 0, %s181
      %s198 = sphi 0, %s182
    $region4: #{tpu_custom_call.1} parent=1 // loop_header_branch
      %19 = sbr.rel (%p17) target = $region8
    $region5: #{tpu_custom_call.1} parent=1 // loop_body
      %s21 = ssub.s32 %s16, 1
      %s22 = ssub.s32 %s16, 2
      %s23 = sadd.s32 %s16, 1
      %s24 = ssub.s32 %s16, %s23
      %p25 = scmp.eq.s32.totalorder %s24, 0
      %s27 = sadd.s32 %s26, 1
      %s28 = scalar_select %p25, %s26, %s27
      %p31 = pneg %p25
      %p32 = scmp.eq.s32.totalorder %s16, 1
      %p33 = por %p31, %p32
      %p34 = scmp.ne.s32.totalorder %s26, %s29
      %p35 = scmp.eq.s32.totalorder %s16, 0
      %p36 = por %p34, %p35
      %p37 = scmp.ne.s32.totalorder %s26, %s29
      %p38 = scmp.eq.s32.totalorder %s21, 1
      %p39 = por %p37, %p38
      %p40 = scmp.ne.s32.totalorder %s29, %s30
      %p41 = scmp.eq.s32.totalorder %s21, 0
      %p42 = por %p40, %p41
      %p43 = scmp.ne.s32.totalorder %s29, %s30
      %p44 = scmp.eq.s32.totalorder %s22, 1
      %p45 = por %p43, %p44
      %p47 = scmp.ne.s32.totalorder %s30, %s46
      %p48 = scmp.eq.s32.totalorder %s22, 0
      %p49 = por %p47, %p48
      %s51 = sadd.s32 %s50, 1
      %p54 = scmp.eq.s32.totalorder %s16, 1
      %p55 = scmp.ne.s32.totalorder %s50, %s52
      %p56 = scmp.eq.s32.totalorder %s16, 0
      %p57 = por %p55, %p56
      %p58 = scmp.ne.s32.totalorder %s50, %s52
      %p59 = scmp.eq.s32.totalorder %s21, 1
      %p60 = por %p58, %p59
      %p61 = scmp.ne.s32.totalorder %s52, %s53
      %p62 = scmp.eq.s32.totalorder %s21, 0
      %p63 = por %p61, %p62
      %p64 = scmp.ne.s32.totalorder %s52, %s53
      %p65 = scmp.eq.s32.totalorder %s22, 1
      %p66 = por %p64, %p65
      %p68 = scmp.ne.s32.totalorder %s53, %s67
      %p69 = scmp.eq.s32.totalorder %s22, 0
      %p70 = por %p68, %p69
      %s72 = sadd.s32 %s71, 1
      %p75 = scmp.eq.s32.totalorder %s16, 1
      %p76 = scmp.ne.s32.totalorder %s71, %s73
      %p77 = scmp.eq.s32.totalorder %s16, 0
      %p78 = por %p76, %p77
      %p79 = scmp.ne.s32.totalorder %s71, %s73
      %p80 = scmp.eq.s32.totalorder %s21, 1
      %p81 = por %p79, %p80
      %p82 = scmp.ne.s32.totalorder %s73, %s74
      %p83 = scmp.eq.s32.totalorder %s21, 0
      %p84 = por %p82, %p83
      %p85 = scmp.ne.s32.totalorder %s73, %s74
      %p86 = scmp.eq.s32.totalorder %s22, 1
      %p87 = por %p85, %p86
      %p89 = scmp.ne.s32.totalorder %s74, %s88
      %p90 = scmp.eq.s32.totalorder %s22, 0
      %p91 = por %p89, %p90
      %s93 = sadd.s32 %s92, 1
      %p96 = scmp.eq.s32.totalorder %s16, 1
      %p97 = scmp.ne.s32.totalorder %s92, %s94
      %p98 = scmp.eq.s32.totalorder %s16, 0
      %p99 = por %p97, %p98
      %p100 = scmp.ne.s32.totalorder %s92, %s94
      %p101 = scmp.eq.s32.totalorder %s21, 1
      %p102 = por %p100, %p101
      %p103 = scmp.ne.s32.totalorder %s94, %s95
      %p104 = scmp.eq.s32.totalorder %s21, 0
      %p105 = por %p103, %p104
      %p106 = scmp.ne.s32.totalorder %s94, %s95
      %p107 = scmp.eq.s32.totalorder %s22, 1
      %p108 = por %p106, %p107
      %p110 = scmp.ne.s32.totalorder %s95, %s109
      %p111 = scmp.eq.s32.totalorder %s22, 0
      %p112 = por %p110, %p111
      %s114 = sadd.s32 %s113, 1
      %p117 = scmp.eq.s32.totalorder %s16, 1
      %p118 = scmp.ne.s32.totalorder %s113, %s115
      %p119 = scmp.eq.s32.totalorder %s16, 0
      %p120 = por %p118, %p119
      %p121 = scmp.ne.s32.totalorder %s113, %s115
      %p122 = scmp.eq.s32.totalorder %s21, 1
      %p123 = por %p121, %p122
      %p124 = scmp.ne.s32.totalorder %s115, %s116
      %p125 = scmp.eq.s32.totalorder %s21, 0
      %p126 = por %p124, %p125
      %p127 = scmp.ne.s32.totalorder %s115, %s116
      %p128 = scmp.eq.s32.totalorder %s22, 1
      %p129 = por %p127, %p128
      %p131 = scmp.ne.s32.totalorder %s116, %s130
      %p132 = scmp.eq.s32.totalorder %s22, 0
      %p133 = por %p131, %p132
      %s135 = sadd.s32 %s134, 1
      %p138 = scmp.eq.s32.totalorder %s16, 1
      %p139 = scmp.ne.s32.totalorder %s134, %s136
      %p140 = scmp.eq.s32.totalorder %s16, 0
      %p141 = por %p139, %p140
      %p142 = scmp.ne.s32.totalorder %s134, %s136
      %p143 = scmp.eq.s32.totalorder %s21, 1
      %p144 = por %p142, %p143
      %p145 = scmp.ne.s32.totalorder %s136, %s137
      %p146 = scmp.eq.s32.totalorder %s21, 0
      %p147 = por %p145, %p146
      %p148 = scmp.ne.s32.totalorder %s136, %s137
      %p149 = scmp.eq.s32.totalorder %s22, 1
      %p150 = por %p148, %p149
      %p152 = scmp.ne.s32.totalorder %s137, %s151
      %p153 = scmp.eq.s32.totalorder %s22, 0
      %p154 = por %p152, %p153
      %s156 = sadd.s32 %s155, 1
      %p159 = scmp.eq.s32.totalorder %s16, 1
      %p160 = scmp.ne.s32.totalorder %s155, %s157
      %p161 = scmp.eq.s32.totalorder %s16, 0
      %p162 = por %p160, %p161
      %p163 = scmp.ne.s32.totalorder %s155, %s157
      %p164 = scmp.eq.s32.totalorder %s21, 1
      %p165 = por %p163, %p164
      %p166 = scmp.ne.s32.totalorder %s157, %s158
      %p167 = scmp.eq.s32.totalorder %s21, 0
      %p168 = por %p166, %p167
      %p169 = scmp.ne.s32.totalorder %s157, %s158
      %p170 = scmp.eq.s32.totalorder %s22, 1
      %p171 = por %p169, %p170
      %p173 = scmp.ne.s32.totalorder %s158, %s172
      %p174 = scmp.eq.s32.totalorder %s22, 0
      %p175 = por %p173, %p174
      %s176 = ssub.s32 %s16, %s23
      %p177 = scmp.eq.s32.totalorder %s176, 0
      %s179 = sadd.s32 %s178, 1
      %s180 = scalar_select %p177, %s178, %s179
      %p183 = pneg %p177
      %p184 = scmp.eq.s32.totalorder %s16, 1
      %p185 = por %p183, %p184
      %p186 = scmp.ne.s32.totalorder %s178, %s181
      %p187 = scmp.eq.s32.totalorder %s16, 0
      %p188 = por %p186, %p187
      %p189 = scmp.ne.s32.totalorder %s178, %s181
      %p190 = scmp.eq.s32.totalorder %s21, 1
      %p191 = por %p189, %p190
      %p192 = scmp.ne.s32.totalorder %s181, %s182
      %p193 = scmp.eq.s32.totalorder %s21, 0
      %p194 = por %p192, %p193
      %p195 = scmp.ne.s32.totalorder %s181, %s182
      %p196 = scmp.eq.s32.totalorder %s22, 1
      %p197 = por %p195, %p196
      %p199 = scmp.ne.s32.totalorder %s182, %s198
      %p200 = scmp.eq.s32.totalorder %s22, 0
      %p201 = por %p199, %p200
      %p202 = scmp.le.s32.totalorder 1, %s16
      %p203 = scmp.lt.s32.totalorder %s16, 3
      %p204 = pnand %p202, %p203
      %p205 = pneg %p204
      // Predicated region
      $region9: #{tpu_custom_call.1} parent=5 // pred_check
        _
      $region10: #{tpu_custom_call.1} parent=5 // pred_check_branch
        %207 = sbr.rel (%p204) target = $region12
      $region11: #{tpu_custom_call.1} parent=5 // pred_region
        %s208 = ssub.s32 %s16, 1
        // Predicated region
        $region13: #{tpu_custom_call.1} parent=11 // pred_check
          %p209 = pneg %p63
        $region14: #{tpu_custom_call.1} parent=11 // pred_check_branch
          %211 = sbr.rel (%p209) target = $region16
        $region15: #{tpu_custom_call.1} parent=11 // pred_region
          _
        $region16: #{tpu_custom_call.1} parent=11 // pred_fallthru
          _
        // Predicated region
        $region17: #{tpu_custom_call.1} parent=11 // pred_check
          %p212 = pneg %p84
        $region18: #{tpu_custom_call.1} parent=11 // pred_check_branch
          %214 = sbr.rel (%p212) target = $region20
        $region19: #{tpu_custom_call.1} parent=11 // pred_region
          _
        $region20: #{tpu_custom_call.1} parent=11 // pred_fallthru
          _
        // Predicated region
        $region21: #{tpu_custom_call.1} parent=11 // pred_check
          %p215 = pneg %p105
        $region22: #{tpu_custom_call.1} parent=11 // pred_check_branch
          %217 = sbr.rel (%p215) target = $region24
        $region23: #{tpu_custom_call.1} parent=11 // pred_region
          _
        $region24: #{tpu_custom_call.1} parent=11 // pred_fallthru
          _
        // Predicated region
        $region25: #{tpu_custom_call.1} parent=11 // pred_check
          %p218 = pneg %p126
        $region26: #{tpu_custom_call.1} parent=11 // pred_check_branch
          %220 = sbr.rel (%p218) target = $region28
        $region27: #{tpu_custom_call.1} parent=11 // pred_region
          _
        $region28: #{tpu_custom_call.1} parent=11 // pred_fallthru
          _
        // Predicated region
        $region29: #{tpu_custom_call.1} parent=11 // pred_check
          %p221 = pneg %p147
        $region30: #{tpu_custom_call.1} parent=11 // pred_check_branch
          %223 = sbr.rel (%p221) target = $region32
        $region31: #{tpu_custom_call.1} parent=11 // pred_region
          _
        $region32: #{tpu_custom_call.1} parent=11 // pred_fallthru
          _
        // Predicated region
        $region33: #{tpu_custom_call.1} parent=11 // pred_check
          %p224 = pneg %p168
        $region34: #{tpu_custom_call.1} parent=11 // pred_check_branch
          %226 = sbr.rel (%p224) target = $region36
        $region35: #{tpu_custom_call.1} parent=11 // pred_region
          _
        $region36: #{tpu_custom_call.1} parent=11 // pred_fallthru
          _
      $region12: #{tpu_custom_call.1} parent=5 // pred_fallthru
        _
      %p227 = scmp.lt.s32.totalorder %s16, 2
      // Predicated region
      $region37: #{tpu_custom_call.1} parent=5 // pred_check
        %p228 = pneg %p227
      $region38: #{tpu_custom_call.1} parent=5 // pred_check_branch
        %230 = sbr.rel (%p228) target = $region40
      $region39: #{tpu_custom_call.1} parent=5 // pred_region
        // Predicated region
        $region41: #{tpu_custom_call.1} parent=39 // pred_check
          %p231 = pneg %p36
        $region42: #{tpu_custom_call.1} parent=39 // pred_check_branch
          %233 = sbr.rel (%p231) target = $region44
        $region43: #{tpu_custom_call.1} parent=39 // pred_region
          %s234 = sand.u32 %s26, 1
          %s235 = sand.u32 %s26, 1
          %s236 = smul.addr %s235, 256
          %s237 = scalar_lea.vmem [#allocation2], %s236
          %s238 = smul.u32 16, %s16
          %s239 = smul.addr %s238, 8
          %s240 = scalar_lea.vmem %s0, %s239
          // Predicated region
          $region45: #{tpu_custom_call.1} parent=43 // pred_check
            _
          $region46: #{tpu_custom_call.1} parent=43 // pred_check_branch
            %242 = sbr.rel (0) target = $region48
          $region47: #{tpu_custom_call.1} parent=43 // pred_region
            // Predicated region
            $region49: #{tpu_custom_call.1} parent=47 // pred_check
              _
            $region50: #{tpu_custom_call.1} parent=47 // pred_check_branch
              %244 = sbr.rel (0) target = $region52
            $region51: #{tpu_custom_call.1} parent=47 // pred_region
              // Predicated region
              $region64: #{tpu_custom_call.1} parent=51 // pred_check
                _
              $region65: #{tpu_custom_call.1} parent=51 // pred_check_branch
                %322 = sbr.rel (0) target = $region67
              $region66: #{tpu_custom_call.1} parent=51 // pred_region
                loop: start=0, step=1, limit=1
                $region68: #{tpu_custom_call.1} parent=66 // loop_pre_header
                  _
                $region69: #{tpu_custom_call.1} parent=66 // loop_header
                  %s324 = sphi 0, %s328
                  %p325 = scmp.ge.s32.totalorder %s324, 1
                  %s329 = sphi %s240, %s240
                  %s330 = sphi %s237, %s237
                $region70: #{tpu_custom_call.1} parent=66 // loop_header_branch
                  %327 = sbr.rel (%p325) target = $region74
                $region71: #{tpu_custom_call.1} parent=66 // loop_body
                  %v331 = vld [vmem:[%s329] sm:$0xff]
                  %332 = vst [vmem:[%s330] sm:$0xff] %v331
                  %v333 = vld [vmem:[%s329 + $0x8] sm:$0xff]
                  %334 = vst [vmem:[%s330 + $0x8] sm:$0xff] %v333
                  %v335 = vld [vmem:[%s329 + $0x10] sm:$0xff]
                  %336 = vst [vmem:[%s330 + $0x10] sm:$0xff] %v335
                  %v337 = vld [vmem:[%s329 + $0x18] sm:$0xff]
                  %338 = vst [vmem:[%s330 + $0x18] sm:$0xff] %v337
                  %v339 = vld [vmem:[%s329 + $0x20] sm:$0xff]
                  %340 = vst [vmem:[%s330 + $0x20] sm:$0xff] %v339
                  %v341 = vld [vmem:[%s329 + $0x28] sm:$0xff]
                  %342 = vst [vmem:[%s330 + $0x28] sm:$0xff] %v341
                  %v343 = vld [vmem:[%s329 + $0x30] sm:$0xff]
                  %344 = vst [vmem:[%s330 + $0x30] sm:$0xff] %v343
                  %v345 = vld [vmem:[%s329 + $0x38] sm:$0xff]
                  %346 = vst [vmem:[%s330 + $0x38] sm:$0xff] %v345
                  %v347 = vld [vmem:[%s329 + $0x40] sm:$0xff]
                  %348 = vst [vmem:[%s330 + $0x40] sm:$0xff] %v347
                  %v349 = vld [vmem:[%s329 + $0x48] sm:$0xff]
                  %350 = vst [vmem:[%s330 + $0x48] sm:$0xff] %v349
                  %v351 = vld [vmem:[%s329 + $0x50] sm:$0xff]
                  %352 = vst [vmem:[%s330 + $0x50] sm:$0xff] %v351
                  %v353 = vld [vmem:[%s329 + $0x58] sm:$0xff]
                  %354 = vst [vmem:[%s330 + $0x58] sm:$0xff] %v353
                  %v355 = vld [vmem:[%s329 + $0x60] sm:$0xff]
                  %356 = vst [vmem:[%s330 + $0x60] sm:$0xff] %v355
                  %v357 = vld [vmem:[%s329 + $0x68] sm:$0xff]
                  %358 = vst [vmem:[%s330 + $0x68] sm:$0xff] %v357
                  %v359 = vld [vmem:[%s329 + $0x70] sm:$0xff]
                  %360 = vst [vmem:[%s330 + $0x70] sm:$0xff] %v359
                  %v361 = vld [vmem:[%s329 + $0x78] sm:$0xff]
                  %362 = vst [vmem:[%s330 + $0x78] sm:$0xff] %v361
                  %v363 = vld [vmem:[%s329 + $0x100] sm:$0xff]
                  %364 = vst [vmem:[%s330 + $0x80] sm:$0xff] %v363
                  %v365 = vld [vmem:[%s329 + $0x108] sm:$0xff]
                  %366 = vst [vmem:[%s330 + $0x88] sm:$0xff] %v365
                  %v367 = vld [vmem:[%s329 + $0x110] sm:$0xff]
                  %368 = vst [vmem:[%s330 + $0x90] sm:$0xff] %v367
                  %v369 = vld [vmem:[%s329 + $0x118] sm:$0xff]
                  %370 = vst [vmem:[%s330 + $0x98] sm:$0xff] %v369
                  %v371 = vld [vmem:[%s329 + $0x120] sm:$0xff]
                  %372 = vst [vmem:[%s330 + $0xa0] sm:$0xff] %v371
                  %v373 = vld [vmem:[%s329 + $0x128] sm:$0xff]
                  %374 = vst [vmem:[%s330 + $0xa8] sm:$0xff] %v373
                  %v375 = vld [vmem:[%s329 + $0x130] sm:$0xff]
                  %376 = vst [vmem:[%s330 + $0xb0] sm:$0xff] %v375
                  %v377 = vld [vmem:[%s329 + $0x138] sm:$0xff]
                  %378 = vst [vmem:[%s330 + $0xb8] sm:$0xff] %v377
                  %v379 = vld [vmem:[%s329 + $0x140] sm:$0xff]
                  %380 = vst [vmem:[%s330 + $0xc0] sm:$0xff] %v379
                  %v381 = vld [vmem:[%s329 + $0x148] sm:$0xff]
                  %382 = vst [vmem:[%s330 + $0xc8] sm:$0xff] %v381
                  %v383 = vld [vmem:[%s329 + $0x150] sm:$0xff]
                  %384 = vst [vmem:[%s330 + $0xd0] sm:$0xff] %v383
                  %v385 = vld [vmem:[%s329 + $0x158] sm:$0xff]
                  %386 = vst [vmem:[%s330 + $0xd8] sm:$0xff] %v385
                  %v387 = vld [vmem:[%s329 + $0x160] sm:$0xff]
                  %388 = vst [vmem:[%s330 + $0xe0] sm:$0xff] %v387
                  %v389 = vld [vmem:[%s329 + $0x168] sm:$0xff]
                  %390 = vst [vmem:[%s330 + $0xe8] sm:$0xff] %v389
                  %v391 = vld [vmem:[%s329 + $0x170] sm:$0xff]
                  %392 = vst [vmem:[%s330 + $0xf0] sm:$0xff] %v391
                  %v393 = vld [vmem:[%s329 + $0x178] sm:$0xff]
                  %394 = vst [vmem:[%s330 + $0xf8] sm:$0xff] %v393
                $region72: #{tpu_custom_call.1} parent=66 // loop_footer
                  %s328 = sadd.s32 1, %s324
                $region73: #{tpu_custom_call.1} parent=66 // loop_footer_branch
                  %323 = sbr.rel target = $region69
                $region74: #{tpu_custom_call.1} parent=66 // loop_exit
                  _
              $region67: #{tpu_custom_call.1} parent=51 // pred_fallthru
                _
              // Predicated region
              $region75: #{tpu_custom_call.1} parent=51 // pred_check
                _
              $region76: #{tpu_custom_call.1} parent=51 // pred_check_branch
                %396 = sbr.rel target = $region78
              $region77: #{tpu_custom_call.1} parent=51 // pred_region
                _
              $region78: #{tpu_custom_call.1} parent=51 // pred_fallthru
                _
            $region52: #{tpu_custom_call.1} parent=47 // pred_fallthru
              _
            // Predicated region
            $region53: #{tpu_custom_call.1} parent=47 // pred_check
              _
            $region54: #{tpu_custom_call.1} parent=47 // pred_check_branch
              %246 = sbr.rel target = $region56
            $region55: #{tpu_custom_call.1} parent=47 // pred_region
              %s248 = ssub.s32 256, 1
              loop: start=0, step=1, limit=1
              $region57: #{tpu_custom_call.1} parent=55 // loop_pre_header
                _
              $region58: #{tpu_custom_call.1} parent=55 // loop_header
                %s250 = sphi 0, %s254
                %p251 = scmp.ge.s32.totalorder %s250, 1
                %s255 = sphi %s240, %s240
                %s256 = sphi %s237, %s237
              $region59: #{tpu_custom_call.1} parent=55 // loop_header_branch
                %253 = sbr.rel (%p251) target = $region63
              $region60: #{tpu_custom_call.1} parent=55 // loop_body
                %v257 = vld [vmem:[%s255] sm:%s248]
                %258 = vst [vmem:[%s256] sm:%s248] %v257
                %v259 = vld [vmem:[%s255 + $0x8] sm:%s248]
                %260 = vst [vmem:[%s256 + $0x8] sm:%s248] %v259
                %v261 = vld [vmem:[%s255 + $0x10] sm:%s248]
                %262 = vst [vmem:[%s256 + $0x10] sm:%s248] %v261
                %v263 = vld [vmem:[%s255 + $0x18] sm:%s248]
                %264 = vst [vmem:[%s256 + $0x18] sm:%s248] %v263
                %v265 = vld [vmem:[%s255 + $0x20] sm:%s248]
                %266 = vst [vmem:[%s256 + $0x20] sm:%s248] %v265
                %v267 = vld [vmem:[%s255 + $0x28] sm:%s248]
                %268 = vst [vmem:[%s256 + $0x28] sm:%s248] %v267
                %v269 = vld [vmem:[%s255 + $0x30] sm:%s248]
                %270 = vst [vmem:[%s256 + $0x30] sm:%s248] %v269
                %v271 = vld [vmem:[%s255 + $0x38] sm:%s248]
                %272 = vst [vmem:[%s256 + $0x38] sm:%s248] %v271
                %v273 = vld [vmem:[%s255 + $0x40] sm:%s248]
                %274 = vst [vmem:[%s256 + $0x40] sm:%s248] %v273
                %v275 = vld [vmem:[%s255 + $0x48] sm:%s248]
                %276 = vst [vmem:[%s256 + $0x48] sm:%s248] %v275
                %v277 = vld [vmem:[%s255 + $0x50] sm:%s248]
                %278 = vst [vmem:[%s256 + $0x50] sm:%s248] %v277
                %v279 = vld [vmem:[%s255 + $0x58] sm:%s248]
                %280 = vst [vmem:[%s256 + $0x58] sm:%s248] %v279
                %v281 = vld [vmem:[%s255 + $0x60] sm:%s248]
                %282 = vst [vmem:[%s256 + $0x60] sm:%s248] %v281
                %v283 = vld [vmem:[%s255 + $0x68] sm:%s248]
                %284 = vst [vmem:[%s256 + $0x68] sm:%s248] %v283
                %v285 = vld [vmem:[%s255 + $0x70] sm:%s248]
                %286 = vst [vmem:[%s256 + $0x70] sm:%s248] %v285
                %v287 = vld [vmem:[%s255 + $0x78] sm:%s248]
                %288 = vst [vmem:[%s256 + $0x78] sm:%s248] %v287
                %v289 = vld [vmem:[%s255 + $0x100] sm:%s248]
                %290 = vst [vmem:[%s256 + $0x80] sm:%s248] %v289
                %v291 = vld [vmem:[%s255 + $0x108] sm:%s248]
                %292 = vst [vmem:[%s256 + $0x88] sm:%s248] %v291
                %v293 = vld [vmem:[%s255 + $0x110] sm:%s248]
                %294 = vst [vmem:[%s256 + $0x90] sm:%s248] %v293
                %v295 = vld [vmem:[%s255 + $0x118] sm:%s248]
                %296 = vst [vmem:[%s256 + $0x98] sm:%s248] %v295
                %v297 = vld [vmem:[%s255 + $0x120] sm:%s248]
                %298 = vst [vmem:[%s256 + $0xa0] sm:%s248] %v297
                %v299 = vld [vmem:[%s255 + $0x128] sm:%s248]
                %300 = vst [vmem:[%s256 + $0xa8] sm:%s248] %v299
                %v301 = vld [vmem:[%s255 + $0x130] sm:%s248]
                %302 = vst [vmem:[%s256 + $0xb0] sm:%s248] %v301
                %v303 = vld [vmem:[%s255 + $0x138] sm:%s248]
                %304 = vst [vmem:[%s256 + $0xb8] sm:%s248] %v303
                %v305 = vld [vmem:[%s255 + $0x140] sm:%s248]
                %306 = vst [vmem:[%s256 + $0xc0] sm:%s248] %v305
                %v307 = vld [vmem:[%s255 + $0x148] sm:%s248]
                %308 = vst [vmem:[%s256 + $0xc8] sm:%s248] %v307
                %v309 = vld [vmem:[%s255 + $0x150] sm:%s248]
                %310 = vst [vmem:[%s256 + $0xd0] sm:%s248] %v309
                %v311 = vld [vmem:[%s255 + $0x158] sm:%s248]
                %312 = vst [vmem:[%s256 + $0xd8] sm:%s248] %v311
                %v313 = vld [vmem:[%s255 + $0x160] sm:%s248]
                %314 = vst [vmem:[%s256 + $0xe0] sm:%s248] %v313
                %v315 = vld [vmem:[%s255 + $0x168] sm:%s248]
                %316 = vst [vmem:[%s256 + $0xe8] sm:%s248] %v315
                %v317 = vld [vmem:[%s255 + $0x170] sm:%s248]
                %318 = vst [vmem:[%s256 + $0xf0] sm:%s248] %v317
                %v319 = vld [vmem:[%s255 + $0x178] sm:%s248]
                %320 = vst [vmem:[%s256 + $0xf8] sm:%s248] %v319
              $region61: #{tpu_custom_call.1} parent=55 // loop_footer
                %s254 = sadd.s32 1, %s250
              $region62: #{tpu_custom_call.1} parent=55 // loop_footer_branch
                %249 = sbr.rel target = $region58
              $region63: #{tpu_custom_call.1} parent=55 // loop_exit
                _
            $region56: #{tpu_custom_call.1} parent=47 // pred_fallthru
              _
          $region48: #{tpu_custom_call.1} parent=43 // pred_fallthru
            _
          %397 = vnop
        $region44: #{tpu_custom_call.1} parent=39 // pred_fallthru
          _
      $region40: #{tpu_custom_call.1} parent=5 // pred_fallthru
        _
      %p398 = scmp.le.s32.totalorder 1, %s16
      %p399 = scmp.lt.s32.totalorder %s16, 3
      %p400 = pnand %p398, %p399
      %p401 = pneg %p400
      // Predicated region
      $region79: #{tpu_custom_call.1} parent=5 // pred_check
        _
      $region80: #{tpu_custom_call.1} parent=5 // pred_check_branch
        %403 = sbr.rel (%p400) target = $region82
      $region81: #{tpu_custom_call.1} parent=5 // pred_region
        %s404 = ssub.s32 %s16, 1
        %s405 = sand.u32 %s29, 1
        %s406 = sand.u32 %s29, 1
        %s407 = smul.addr %s406, 256
        %s408 = scalar_lea.vmem [#allocation2], %s407
        // Predicated region
        $region83: #{tpu_custom_call.1} parent=81 // pred_check
          %p409 = pneg %p42
        $region84: #{tpu_custom_call.1} parent=81 // pred_check_branch
          %411 = sbr.rel (%p409) target = $region86
        $region85: #{tpu_custom_call.1} parent=81 // pred_region
          _
        $region86: #{tpu_custom_call.1} parent=81 // pred_fallthru
          _
        %s412 = sand.u32 %s29, 1
        %s413 = sand.u32 %s29, 1
        %s414 = smul.addr %s413, 256
        %s415 = scalar_lea.vmem [#allocation2], %s414
        %p416 = pneg %p42
        %p417 = pneg %p39
        %p418 = pneg %p63
        %p419 = pneg %p60
        %p420 = pneg %p84
        %p421 = pneg %p81
        %p422 = pneg %p105
        %p423 = pneg %p102
        %p424 = pneg %p126
        %p425 = pneg %p123
        %p426 = pneg %p147
        %p427 = pneg %p144
        %p428 = pneg %p168
        %p429 = pneg %p165
        %p430 = pneg %p194
        %p431 = pneg %p191
        %s432 = sand.u32 %s181, 1
        %s433 = scalar_lea.sflag [#allocation4], %s432
        %s434 = sand.u32 %s181, 1
        %s435 = scalar_lea.vmem [#allocation3], %s434
        %s436 = smul.u32 16, %s21
        %v437 = vld [vmem:[%s408] sm:$0xff]
        %v438 = vld [vmem:[%s408 + $0x8] sm:$0xff]
        %v439 = vld [vmem:[%s408 + $0x10] sm:$0xff]
        %v440 = vld [vmem:[%s408 + $0x18] sm:$0xff]
        %v441 = vld [vmem:[%s408 + $0x20] sm:$0xff]
        %v442 = vld [vmem:[%s408 + $0x28] sm:$0xff]
        %v443 = vld [vmem:[%s408 + $0x30] sm:$0xff]
        %v444 = vld [vmem:[%s408 + $0x38] sm:$0xff]
        %v445 = vld [vmem:[%s408 + $0x40] sm:$0xff]
        %v446 = vld [vmem:[%s408 + $0x48] sm:$0xff]
        %v447 = vld [vmem:[%s408 + $0x50] sm:$0xff]
        %v448 = vld [vmem:[%s408 + $0x58] sm:$0xff]
        %v449 = vld [vmem:[%s408 + $0x60] sm:$0xff]
        %v450 = vld [vmem:[%s408 + $0x68] sm:$0xff]
        %v451 = vld [vmem:[%s408 + $0x70] sm:$0xff]
        %v452 = vld [vmem:[%s408 + $0x78] sm:$0xff]
        %v453 = vld [vmem:[%s408 + $0x80] sm:$0xff]
        %v454 = vld [vmem:[%s408 + $0x88] sm:$0xff]
        %v455 = vld [vmem:[%s408 + $0x90] sm:$0xff]
        %v456 = vld [vmem:[%s408 + $0x98] sm:$0xff]
        %v457 = vld [vmem:[%s408 + $0xa0] sm:$0xff]
        %v458 = vld [vmem:[%s408 + $0xa8] sm:$0xff]
        %v459 = vld [vmem:[%s408 + $0xb0] sm:$0xff]
        %v460 = vld [vmem:[%s408 + $0xb8] sm:$0xff]
        %v461 = vld [vmem:[%s408 + $0xc0] sm:$0xff]
        %v462 = vld [vmem:[%s408 + $0xc8] sm:$0xff]
        %v463 = vld [vmem:[%s408 + $0xd0] sm:$0xff]
        %v464 = vld [vmem:[%s408 + $0xd8] sm:$0xff]
        %v465 = vld [vmem:[%s408 + $0xe0] sm:$0xff]
        %v466 = vld [vmem:[%s408 + $0xe8] sm:$0xff]
        %v467 = vld [vmem:[%s408 + $0xf0] sm:$0xff]
        %v468 = vld [vmem:[%s408 + $0xf8] sm:$0xff]
        %v469 = vld [vmem:[%s1] sm:$0xff]
        %v470 = vld [vmem:[%s1 + $0x8] sm:$0xff]
        %v471 = vld [vmem:[%s1 + $0x10] sm:$0xff]
        %v472 = vld [vmem:[%s1 + $0x18] sm:$0xff]
        %v473 = vld [vmem:[%s2] sm:$0x1]
        %v475 = vperm.slane %v473, 0
        %vm477 = vcmask 261120
        %v479 = vsel %vm477, %v437, 0
        %v482 = vsel %vm477, %v438, 0
        %v485 = vsel %vm477, %v439, 0
        %v488 = vsel %vm477, %v440, 0
        %v491 = vsel %vm477, %v441, 0
        %v494 = vsel %vm477, %v442, 0
        %v497 = vsel %vm477, %v443, 0
        %v500 = vsel %vm477, %v444, 0
        %v503 = vsel %vm477, %v445, 0
        %v506 = vsel %vm477, %v446, 0
        %v509 = vsel %vm477, %v447, 0
        %v512 = vsel %vm477, %v448, 0
        %v515 = vsel %vm477, %v449, 0
        %v518 = vsel %vm477, %v450, 0
        %v521 = vsel %vm477, %v451, 0
        %v524 = vsel %vm477, %v452, 0
        %v527 = vsel %vm477, %v453, 0
        %v530 = vsel %vm477, %v454, 0
        %v533 = vsel %vm477, %v455, 0
        %v536 = vsel %vm477, %v456, 0
        %v539 = vsel %vm477, %v457, 0
        %v542 = vsel %vm477, %v458, 0
        %v545 = vsel %vm477, %v459, 0
        %v548 = vsel %vm477, %v460, 0
        %v551 = vsel %vm477, %v461, 0
        %v554 = vsel %vm477, %v462, 0
        %v557 = vsel %vm477, %v463, 0
        %v560 = vsel %vm477, %v464, 0
        %v563 = vsel %vm477, %v465, 0
        %v566 = vsel %vm477, %v466, 0
        %v569 = vsel %vm477, %v467, 0
        %v572 = vsel %vm477, %v468, 0
        %574 = vmatpush.msra.mxu0 0.0
        %575 = vmatpush.msra.mxu0 0.0
        %576 = vmatpush.msra.mxu0 0.0
        %577 = vmatpush.msra.mxu0 0.0
        %578 = vmatpush.msra.mxu0 0.0
        %579 = vmatpush.msra.mxu0 0.0
        %580 = vmatpush.msra.mxu0 0.0
        %581 = vmatpush.msra.mxu0 0.0
        %582 = vmatpush.msra.mxu0 0.0
        %583 = vmatpush.msra.mxu0 0.0
        %584 = vmatpush.msra.mxu0 0.0
        %585 = vmatpush.msra.mxu0 0.0
        %586 = vmatpush.msra.mxu0 %v472
        %587 = vmatpush.msra.mxu0 %v471
        %588 = vmatpush.msra.mxu0 %v470
        %589 = vmatpush.msra.mxu0 %v469
        %590 = vmatmul.f32.gmra.mxu0 %v479
        %v591 = vpop.f32.mrf.mxu0
        %v592 = vadd.f32 %v475, %v591
        %593 = vmatmul.f32.gmra.mxu0 %v482
        %v594 = vpop.f32.mrf.mxu0
        %v595 = vadd.f32 %v475, %v594
        %596 = vmatmul.f32.gmra.mxu0 %v485
        %v597 = vpop.f32.mrf.mxu0
        %v598 = vadd.f32 %v475, %v597
        %599 = vmatmul.f32.gmra.mxu0 %v488
        %v600 = vpop.f32.mrf.mxu0
        %v601 = vadd.f32 %v475, %v600
        %602 = vmatmul.f32.gmra.mxu0 %v491
        %v603 = vpop.f32.mrf.mxu0
        %v604 = vadd.f32 %v475, %v603
        %605 = vmatmul.f32.gmra.mxu0 %v494
        %v606 = vpop.f32.mrf.mxu0
        %v607 = vadd.f32 %v475, %v606
        %608 = vmatmul.f32.gmra.mxu0 %v497
        %v609 = vpop.f32.mrf.mxu0
        %v610 = vadd.f32 %v475, %v609
        %611 = vmatmul.f32.gmra.mxu0 %v500
        %v612 = vpop.f32.mrf.mxu0
        %v613 = vadd.f32 %v475, %v612
        %614 = vmatmul.f32.gmra.mxu0 %v503
        %v615 = vpop.f32.mrf.mxu0
        %v616 = vadd.f32 %v475, %v615
        %617 = vmatmul.f32.gmra.mxu0 %v506
        %v618 = vpop.f32.mrf.mxu0
        %v619 = vadd.f32 %v475, %v618
        %620 = vmatmul.f32.gmra.mxu0 %v509
        %v621 = vpop.f32.mrf.mxu0
        %v622 = vadd.f32 %v475, %v621
        %623 = vmatmul.f32.gmra.mxu0 %v512
        %v624 = vpop.f32.mrf.mxu0
        %v625 = vadd.f32 %v475, %v624
        %626 = vmatmul.f32.gmra.mxu0 %v515
        %v627 = vpop.f32.mrf.mxu0
        %v628 = vadd.f32 %v475, %v627
        %629 = vmatmul.f32.gmra.mxu0 %v518
        %v630 = vpop.f32.mrf.mxu0
        %v631 = vadd.f32 %v475, %v630
        %632 = vmatmul.f32.gmra.mxu0 %v521
        %v633 = vpop.f32.mrf.mxu0
        %v634 = vadd.f32 %v475, %v633
        %635 = vmatmul.f32.gmra.mxu0 %v524
        %v636 = vpop.f32.mrf.mxu0
        %v637 = vadd.f32 %v475, %v636
        %638 = vmatmul.f32.gmra.mxu0 %v527
        %v639 = vpop.f32.mrf.mxu0
        %v640 = vadd.f32 %v475, %v639
        %641 = vmatmul.f32.gmra.mxu0 %v530
        %v642 = vpop.f32.mrf.mxu0
        %v643 = vadd.f32 %v475, %v642
        %644 = vmatmul.f32.gmra.mxu0 %v533
        %v645 = vpop.f32.mrf.mxu0
        %v646 = vadd.f32 %v475, %v645
        %647 = vmatmul.f32.gmra.mxu0 %v536
        %v648 = vpop.f32.mrf.mxu0
        %v649 = vadd.f32 %v475, %v648
        %650 = vmatmul.f32.gmra.mxu0 %v539
        %v651 = vpop.f32.mrf.mxu0
        %v652 = vadd.f32 %v475, %v651
        %653 = vmatmul.f32.gmra.mxu0 %v542
        %v654 = vpop.f32.mrf.mxu0
        %v655 = vadd.f32 %v475, %v654
        %656 = vmatmul.f32.gmra.mxu0 %v545
        %v657 = vpop.f32.mrf.mxu0
        %v658 = vadd.f32 %v475, %v657
        %659 = vmatmul.f32.gmra.mxu0 %v548
        %v660 = vpop.f32.mrf.mxu0
        %v661 = vadd.f32 %v475, %v660
        %662 = vmatmul.f32.gmra.mxu0 %v551
        %v663 = vpop.f32.mrf.mxu0
        %v664 = vadd.f32 %v475, %v663
        %665 = vmatmul.f32.gmra.mxu0 %v554
        %v666 = vpop.f32.mrf.mxu0
        %v667 = vadd.f32 %v475, %v666
        %668 = vmatmul.f32.gmra.mxu0 %v557
        %v669 = vpop.f32.mrf.mxu0
        %v670 = vadd.f32 %v475, %v669
        %671 = vmatmul.f32.gmra.mxu0 %v560
        %v672 = vpop.f32.mrf.mxu0
        %v673 = vadd.f32 %v475, %v672
        %674 = vmatmul.f32.gmra.mxu0 %v563
        %v675 = vpop.f32.mrf.mxu0
        %v676 = vadd.f32 %v475, %v675
        %677 = vmatmul.f32.gmra.mxu0 %v566
        %v678 = vpop.f32.mrf.mxu0
        %v679 = vadd.f32 %v475, %v678
        %680 = vmatmul.f32.gmra.mxu0 %v569
        %v681 = vpop.f32.mrf.mxu0
        %v682 = vadd.f32 %v475, %v681
        %683 = vmatmul.f32.gmra.mxu0 %v572
        %v684 = vpop.f32.mrf.mxu0
        %v685 = vadd.f32 %v475, %v684
        %686 = vdwg.mxu0
        %v687 = vmax.f32 %v592, 0.0
        %v688 = vmax.f32 %v595, 0.0
        %v689 = vmax.f32 %v598, 0.0
        %v690 = vmax.f32 %v601, 0.0
        %v691 = vmax.f32 %v604, 0.0
        %v692 = vmax.f32 %v607, 0.0
        %v693 = vmax.f32 %v610, 0.0
        %v694 = vmax.f32 %v613, 0.0
        %v695 = vmax.f32 %v616, 0.0
        %v696 = vmax.f32 %v619, 0.0
        %v697 = vmax.f32 %v622, 0.0
        %v698 = vmax.f32 %v625, 0.0
        %v699 = vmax.f32 %v628, 0.0
        %v700 = vmax.f32 %v631, 0.0
        %v701 = vmax.f32 %v634, 0.0
        %v702 = vmax.f32 %v637, 0.0
        %v703 = vmax.f32 %v640, 0.0
        %v704 = vmax.f32 %v643, 0.0
        %v705 = vmax.f32 %v646, 0.0
        %v706 = vmax.f32 %v649, 0.0
        %v707 = vmax.f32 %v652, 0.0
        %v708 = vmax.f32 %v655, 0.0
        %v709 = vmax.f32 %v658, 0.0
        %v710 = vmax.f32 %v661, 0.0
        %v711 = vmax.f32 %v664, 0.0
        %v712 = vmax.f32 %v667, 0.0
        %v713 = vmax.f32 %v670, 0.0
        %v714 = vmax.f32 %v673, 0.0
        %v715 = vmax.f32 %v676, 0.0
        %v716 = vmax.f32 %v679, 0.0
        %v717 = vmax.f32 %v682, 0.0
        %v718 = vmax.f32 %v685, 0.0
        %v719 = vld [vmem:[%s3] sm:$0xff]
        %v720 = vld [vmem:[%s3 + $0x8] sm:$0xff]
        %v721 = vld [vmem:[%s3 + $0x10] sm:$0xff]
        %v722 = vld [vmem:[%s3 + $0x18] sm:$0xff]
        %v723 = vld [vmem:[%s3 + $0x20] sm:$0xff]
        %v724 = vld [vmem:[%s3 + $0x28] sm:$0xff]
        %v725 = vld [vmem:[%s3 + $0x30] sm:$0xff]
        %v726 = vld [vmem:[%s3 + $0x38] sm:$0xff]
        %v727 = vld [vmem:[%s4] sm:$0x1]
        %v729 = vperm.slane %v727, 0
        %vm731 = vcmask 523264
        %v733 = vsel %vm731, %v687, 0
        %v736 = vsel %vm731, %v688, 0
        %v739 = vsel %vm731, %v689, 0
        %v742 = vsel %vm731, %v690, 0
        %v745 = vsel %vm731, %v691, 0
        %v748 = vsel %vm731, %v692, 0
        %v751 = vsel %vm731, %v693, 0
        %v754 = vsel %vm731, %v694, 0
        %v757 = vsel %vm731, %v695, 0
        %v760 = vsel %vm731, %v696, 0
        %v763 = vsel %vm731, %v697, 0
        %v766 = vsel %vm731, %v698, 0
        %v769 = vsel %vm731, %v699, 0
        %v772 = vsel %vm731, %v700, 0
        %v775 = vsel %vm731, %v701, 0
        %v778 = vsel %vm731, %v702, 0
        %v781 = vsel %vm731, %v703, 0
        %v784 = vsel %vm731, %v704, 0
        %v787 = vsel %vm731, %v705, 0
        %v790 = vsel %vm731, %v706, 0
        %v793 = vsel %vm731, %v707, 0
        %v796 = vsel %vm731, %v708, 0
        %v799 = vsel %vm731, %v709, 0
        %v802 = vsel %vm731, %v710, 0
        %v805 = vsel %vm731, %v711, 0
        %v808 = vsel %vm731, %v712, 0
        %v811 = vsel %vm731, %v713, 0
        %v814 = vsel %vm731, %v714, 0
        %v817 = vsel %vm731, %v715, 0
        %v820 = vsel %vm731, %v716, 0
        %v823 = vsel %vm731, %v717, 0
        %v826 = vsel %vm731, %v718, 0
        %828 = vmatpush.msra.mxu0 0.0
        %829 = vmatpush.msra.mxu0 0.0
        %830 = vmatpush.msra.mxu0 0.0
        %831 = vmatpush.msra.mxu0 0.0
        %832 = vmatpush.msra.mxu0 0.0
        %833 = vmatpush.msra.mxu0 0.0
        %834 = vmatpush.msra.mxu0 0.0
        %835 = vmatpush.msra.mxu0 0.0
        %836 = vmatpush.msra.mxu0 %v726
        %837 = vmatpush.msra.mxu0 %v725
        %838 = vmatpush.msra.mxu0 %v724
        %839 = vmatpush.msra.mxu0 %v723
        %840 = vmatpush.msra.mxu0 %v722
        %841 = vmatpush.msra.mxu0 %v721
        %842 = vmatpush.msra.mxu0 %v720
        %843 = vmatpush.msra.mxu0 %v719
        %844 = vmatmul.f32.gmra.mxu0 %v733
        %v845 = vpop.f32.mrf.mxu0
        %v846 = vadd.f32 %v729, %v845
        %847 = vmatmul.f32.gmra.mxu0 %v736
        %v848 = vpop.f32.mrf.mxu0
        %v849 = vadd.f32 %v729, %v848
        %850 = vmatmul.f32.gmra.mxu0 %v739
        %v851 = vpop.f32.mrf.mxu0
        %v852 = vadd.f32 %v729, %v851
        %853 = vmatmul.f32.gmra.mxu0 %v742
        %v854 = vpop.f32.mrf.mxu0
        %v855 = vadd.f32 %v729, %v854
        %856 = vmatmul.f32.gmra.mxu0 %v745
        %v857 = vpop.f32.mrf.mxu0
        %v858 = vadd.f32 %v729, %v857
        %859 = vmatmul.f32.gmra.mxu0 %v748
        %v860 = vpop.f32.mrf.mxu0
        %v861 = vadd.f32 %v729, %v860
        %862 = vmatmul.f32.gmra.mxu0 %v751
        %v863 = vpop.f32.mrf.mxu0
        %v864 = vadd.f32 %v729, %v863
        %865 = vmatmul.f32.gmra.mxu0 %v754
        %v866 = vpop.f32.mrf.mxu0
        %v867 = vadd.f32 %v729, %v866
        %868 = vmatmul.f32.gmra.mxu0 %v757
        %v869 = vpop.f32.mrf.mxu0
        %v870 = vadd.f32 %v729, %v869
        %871 = vmatmul.f32.gmra.mxu0 %v760
        %v872 = vpop.f32.mrf.mxu0
        %v873 = vadd.f32 %v729, %v872
        %874 = vmatmul.f32.gmra.mxu0 %v763
        %v875 = vpop.f32.mrf.mxu0
        %v876 = vadd.f32 %v729, %v875
        %877 = vmatmul.f32.gmra.mxu0 %v766
        %v878 = vpop.f32.mrf.mxu0
        %v879 = vadd.f32 %v729, %v878
        %880 = vmatmul.f32.gmra.mxu0 %v769
        %v881 = vpop.f32.mrf.mxu0
        %v882 = vadd.f32 %v729, %v881
        %883 = vmatmul.f32.gmra.mxu0 %v772
        %v884 = vpop.f32.mrf.mxu0
        %v885 = vadd.f32 %v729, %v884
        %886 = vmatmul.f32.gmra.mxu0 %v775
        %v887 = vpop.f32.mrf.mxu0
        %v888 = vadd.f32 %v729, %v887
        %889 = vmatmul.f32.gmra.mxu0 %v778
        %v890 = vpop.f32.mrf.mxu0
        %v891 = vadd.f32 %v729, %v890
        %892 = vmatmul.f32.gmra.mxu0 %v781
        %v893 = vpop.f32.mrf.mxu0
        %v894 = vadd.f32 %v729, %v893
        %895 = vmatmul.f32.gmra.mxu0 %v784
        %v896 = vpop.f32.mrf.mxu0
        %v897 = vadd.f32 %v729, %v896
        %898 = vmatmul.f32.gmra.mxu0 %v787
        %v899 = vpop.f32.mrf.mxu0
        %v900 = vadd.f32 %v729, %v899
        %901 = vmatmul.f32.gmra.mxu0 %v790
        %v902 = vpop.f32.mrf.mxu0
        %v903 = vadd.f32 %v729, %v902
        %904 = vmatmul.f32.gmra.mxu0 %v793
        %v905 = vpop.f32.mrf.mxu0
        %v906 = vadd.f32 %v729, %v905
        %907 = vmatmul.f32.gmra.mxu0 %v796
        %v908 = vpop.f32.mrf.mxu0
        %v909 = vadd.f32 %v729, %v908
        %910 = vmatmul.f32.gmra.mxu0 %v799
        %v911 = vpop.f32.mrf.mxu0
        %v912 = vadd.f32 %v729, %v911
        %913 = vmatmul.f32.gmra.mxu0 %v802
        %v914 = vpop.f32.mrf.mxu0
        %v915 = vadd.f32 %v729, %v914
        %916 = vmatmul.f32.gmra.mxu0 %v805
        %v917 = vpop.f32.mrf.mxu0
        %v918 = vadd.f32 %v729, %v917
        %919 = vmatmul.f32.gmra.mxu0 %v808
        %v920 = vpop.f32.mrf.mxu0
        %v921 = vadd.f32 %v729, %v920
        %922 = vmatmul.f32.gmra.mxu0 %v811
        %v923 = vpop.f32.mrf.mxu0
        %v924 = vadd.f32 %v729, %v923
        %925 = vmatmul.f32.gmra.mxu0 %v814
        %v926 = vpop.f32.mrf.mxu0
        %v927 = vadd.f32 %v729, %v926
        %928 = vmatmul.f32.gmra.mxu0 %v817
        %v929 = vpop.f32.mrf.mxu0
        %v930 = vadd.f32 %v729, %v929
        %931 = vmatmul.f32.gmra.mxu0 %v820
        %v932 = vpop.f32.mrf.mxu0
        %v933 = vadd.f32 %v729, %v932
        %934 = vmatmul.f32.gmra.mxu0 %v823
        %v935 = vpop.f32.mrf.mxu0
        %v936 = vadd.f32 %v729, %v935
        %937 = vmatmul.f32.gmra.mxu0 %v826
        %v938 = vpop.f32.mrf.mxu0
        %v939 = vadd.f32 %v729, %v938
        %940 = vdwg.mxu0
        %v941 = vmax.f32 %v846, 0.0
        %v942 = vmax.f32 %v849, 0.0
        %v943 = vmax.f32 %v852, 0.0
        %v944 = vmax.f32 %v855, 0.0
        %v945 = vmax.f32 %v858, 0.0
        %v946 = vmax.f32 %v861, 0.0
        %v947 = vmax.f32 %v864, 0.0
        %v948 = vmax.f32 %v867, 0.0
        %v949 = vmax.f32 %v870, 0.0
        %v950 = vmax.f32 %v873, 0.0
        %v951 = vmax.f32 %v876, 0.0
        %v952 = vmax.f32 %v879, 0.0
        %v953 = vmax.f32 %v882, 0.0
        %v954 = vmax.f32 %v885, 0.0
        %v955 = vmax.f32 %v888, 0.0
        %v956 = vmax.f32 %v891, 0.0
        %v957 = vmax.f32 %v894, 0.0
        %v958 = vmax.f32 %v897, 0.0
        %v959 = vmax.f32 %v900, 0.0
        %v960 = vmax.f32 %v903, 0.0
        %v961 = vmax.f32 %v906, 0.0
        %v962 = vmax.f32 %v909, 0.0
        %v963 = vmax.f32 %v912, 0.0
        %v964 = vmax.f32 %v915, 0.0
        %v965 = vmax.f32 %v918, 0.0
        %v966 = vmax.f32 %v921, 0.0
        %v967 = vmax.f32 %v924, 0.0
        %v968 = vmax.f32 %v927, 0.0
        %v969 = vmax.f32 %v930, 0.0
        %v970 = vmax.f32 %v933, 0.0
        %v971 = vmax.f32 %v936, 0.0
        %v972 = vmax.f32 %v939, 0.0
        %v973 = vld [vmem:[%s5] sm:$0xff]
        %v974 = vld [vmem:[%s5 + $0x8] sm:$0xff]
        %v975 = vld [vmem:[%s5 + $0x10] sm:$0xff]
        %v976 = vld [vmem:[%s5 + $0x18] sm:$0xff]
        %v977 = vld [vmem:[%s5 + $0x20] sm:$0xff]
        %v978 = vld [vmem:[%s5 + $0x28] sm:$0xff]
        %v979 = vld [vmem:[%s5 + $0x30] sm:$0xff]
        %v980 = vld [vmem:[%s5 + $0x38] sm:$0xff]
        %v981 = vld [vmem:[%s6] sm:$0x1]
        %v983 = vperm.slane %v981, 0
        %v986 = vsel %vm731, %v941, 0
        %v989 = vsel %vm731, %v942, 0
        %v992 = vsel %vm731, %v943, 0
        %v995 = vsel %vm731, %v944, 0
        %v998 = vsel %vm731, %v945, 0
        %v1001 = vsel %vm731, %v946, 0
        %v1004 = vsel %vm731, %v947, 0
        %v1007 = vsel %vm731, %v948, 0
        %v1010 = vsel %vm731, %v949, 0
        %v1013 = vsel %vm731, %v950, 0
        %v1016 = vsel %vm731, %v951, 0
        %v1019 = vsel %vm731, %v952, 0
        %v1022 = vsel %vm731, %v953, 0
        %v1025 = vsel %vm731, %v954, 0
        %v1028 = vsel %vm731, %v955, 0
        %v1031 = vsel %vm731, %v956, 0
        %v1034 = vsel %vm731, %v957, 0
        %v1037 = vsel %vm731, %v958, 0
        %v1040 = vsel %vm731, %v959, 0
        %v1043 = vsel %vm731, %v960, 0
        %v1046 = vsel %vm731, %v961, 0
        %v1049 = vsel %vm731, %v962, 0
        %v1052 = vsel %vm731, %v963, 0
        %v1055 = vsel %vm731, %v964, 0
        %v1058 = vsel %vm731, %v965, 0
        %v1061 = vsel %vm731, %v966, 0
        %v1064 = vsel %vm731, %v967, 0
        %v1067 = vsel %vm731, %v968, 0
        %v1070 = vsel %vm731, %v969, 0
        %v1073 = vsel %vm731, %v970, 0
        %v1076 = vsel %vm731, %v971, 0
        %v1079 = vsel %vm731, %v972, 0
        %1081 = vmatpush.msra.mxu0 0.0
        %1082 = vmatpush.msra.mxu0 0.0
        %1083 = vmatpush.msra.mxu0 0.0
        %1084 = vmatpush.msra.mxu0 0.0
        %1085 = vmatpush.msra.mxu0 0.0
        %1086 = vmatpush.msra.mxu0 0.0
        %1087 = vmatpush.msra.mxu0 0.0
        %1088 = vmatpush.msra.mxu0 0.0
        %1089 = vmatpush.msra.mxu0 %v980
        %1090 = vmatpush.msra.mxu0 %v979
        %1091 = vmatpush.msra.mxu0 %v978
        %1092 = vmatpush.msra.mxu0 %v977
        %1093 = vmatpush.msra.mxu0 %v976
        %1094 = vmatpush.msra.mxu0 %v975
        %1095 = vmatpush.msra.mxu0 %v974
        %1096 = vmatpush.msra.mxu0 %v973
        %1097 = vmatmul.f32.gmra.mxu0 %v986
        %v1098 = vpop.f32.mrf.mxu0
        %v1099 = vadd.f32 %v983, %v1098
        %1100 = vmatmul.f32.gmra.mxu0 %v989
        %v1101 = vpop.f32.mrf.mxu0
        %v1102 = vadd.f32 %v983, %v1101
        %1103 = vmatmul.f32.gmra.mxu0 %v992
        %v1104 = vpop.f32.mrf.mxu0
        %v1105 = vadd.f32 %v983, %v1104
        %1106 = vmatmul.f32.gmra.mxu0 %v995
        %v1107 = vpop.f32.mrf.mxu0
        %v1108 = vadd.f32 %v983, %v1107
        %1109 = vmatmul.f32.gmra.mxu0 %v998
        %v1110 = vpop.f32.mrf.mxu0
        %v1111 = vadd.f32 %v983, %v1110
        %1112 = vmatmul.f32.gmra.mxu0 %v1001
        %v1113 = vpop.f32.mrf.mxu0
        %v1114 = vadd.f32 %v983, %v1113
        %1115 = vmatmul.f32.gmra.mxu0 %v1004
        %v1116 = vpop.f32.mrf.mxu0
        %v1117 = vadd.f32 %v983, %v1116
        %1118 = vmatmul.f32.gmra.mxu0 %v1007
        %v1119 = vpop.f32.mrf.mxu0
        %v1120 = vadd.f32 %v983, %v1119
        %1121 = vmatmul.f32.gmra.mxu0 %v1010
        %v1122 = vpop.f32.mrf.mxu0
        %v1123 = vadd.f32 %v983, %v1122
        %1124 = vmatmul.f32.gmra.mxu0 %v1013
        %v1125 = vpop.f32.mrf.mxu0
        %v1126 = vadd.f32 %v983, %v1125
        %1127 = vmatmul.f32.gmra.mxu0 %v1016
        %v1128 = vpop.f32.mrf.mxu0
        %v1129 = vadd.f32 %v983, %v1128
        %1130 = vmatmul.f32.gmra.mxu0 %v1019
        %v1131 = vpop.f32.mrf.mxu0
        %v1132 = vadd.f32 %v983, %v1131
        %1133 = vmatmul.f32.gmra.mxu0 %v1022
        %v1134 = vpop.f32.mrf.mxu0
        %v1135 = vadd.f32 %v983, %v1134
        %1136 = vmatmul.f32.gmra.mxu0 %v1025
        %v1137 = vpop.f32.mrf.mxu0
        %v1138 = vadd.f32 %v983, %v1137
        %1139 = vmatmul.f32.gmra.mxu0 %v1028
        %v1140 = vpop.f32.mrf.mxu0
        %v1141 = vadd.f32 %v983, %v1140
        %1142 = vmatmul.f32.gmra.mxu0 %v1031
        %v1143 = vpop.f32.mrf.mxu0
        %v1144 = vadd.f32 %v983, %v1143
        %1145 = vmatmul.f32.gmra.mxu0 %v1034
        %v1146 = vpop.f32.mrf.mxu0
        %v1147 = vadd.f32 %v983, %v1146
        %1148 = vmatmul.f32.gmra.mxu0 %v1037
        %v1149 = vpop.f32.mrf.mxu0
        %v1150 = vadd.f32 %v983, %v1149
        %1151 = vmatmul.f32.gmra.mxu0 %v1040
        %v1152 = vpop.f32.mrf.mxu0
        %v1153 = vadd.f32 %v983, %v1152
        %1154 = vmatmul.f32.gmra.mxu0 %v1043
        %v1155 = vpop.f32.mrf.mxu0
        %v1156 = vadd.f32 %v983, %v1155
        %1157 = vmatmul.f32.gmra.mxu0 %v1046
        %v1158 = vpop.f32.mrf.mxu0
        %v1159 = vadd.f32 %v983, %v1158
        %1160 = vmatmul.f32.gmra.mxu0 %v1049
        %v1161 = vpop.f32.mrf.mxu0
        %v1162 = vadd.f32 %v983, %v1161
        %1163 = vmatmul.f32.gmra.mxu0 %v1052
        %v1164 = vpop.f32.mrf.mxu0
        %v1165 = vadd.f32 %v983, %v1164
        %1166 = vmatmul.f32.gmra.mxu0 %v1055
        %v1167 = vpop.f32.mrf.mxu0
        %v1168 = vadd.f32 %v983, %v1167
        %1169 = vmatmul.f32.gmra.mxu0 %v1058
        %v1170 = vpop.f32.mrf.mxu0
        %v1171 = vadd.f32 %v983, %v1170
        %1172 = vmatmul.f32.gmra.mxu0 %v1061
        %v1173 = vpop.f32.mrf.mxu0
        %v1174 = vadd.f32 %v983, %v1173
        %1175 = vmatmul.f32.gmra.mxu0 %v1064
        %v1176 = vpop.f32.mrf.mxu0
        %v1177 = vadd.f32 %v983, %v1176
        %1178 = vmatmul.f32.gmra.mxu0 %v1067
        %v1179 = vpop.f32.mrf.mxu0
        %v1180 = vadd.f32 %v983, %v1179
        %1181 = vmatmul.f32.gmra.mxu0 %v1070
        %v1182 = vpop.f32.mrf.mxu0
        %v1183 = vadd.f32 %v983, %v1182
        %1184 = vmatmul.f32.gmra.mxu0 %v1073
        %v1185 = vpop.f32.mrf.mxu0
        %v1186 = vadd.f32 %v983, %v1185
        %1187 = vmatmul.f32.gmra.mxu0 %v1076
        %v1188 = vpop.f32.mrf.mxu0
        %v1189 = vadd.f32 %v983, %v1188
        %1190 = vmatmul.f32.gmra.mxu0 %v1079
        %v1191 = vpop.f32.mrf.mxu0
        %v1192 = vadd.f32 %v983, %v1191
        %1193 = vdwg.mxu0
        %v1194 = vsub.f32 %v1099, %v1147
        %v1195 = vsub.f32 %v1102, %v1150
        %v1196 = vsub.f32 %v1105, %v1153
        %v1197 = vsub.f32 %v1108, %v1156
        %v1198 = vsub.f32 %v1111, %v1159
        %v1199 = vsub.f32 %v1114, %v1162
        %v1200 = vsub.f32 %v1117, %v1165
        %v1201 = vsub.f32 %v1120, %v1168
        %v1202 = vsub.f32 %v1123, %v1171
        %v1203 = vsub.f32 %v1126, %v1174
        %v1204 = vsub.f32 %v1129, %v1177
        %v1205 = vsub.f32 %v1132, %v1180
        %v1206 = vsub.f32 %v1135, %v1183
        %v1207 = vsub.f32 %v1138, %v1186
        %v1208 = vsub.f32 %v1141, %v1189
        %v1209 = vsub.f32 %v1144, %v1192
        %v1210 = vmul.f32 %v1194, %v1194
        %v1211 = vmul.f32 %v1195, %v1195
        %v1212 = vmul.f32 %v1196, %v1196
        %v1213 = vmul.f32 %v1197, %v1197
        %v1214 = vmul.f32 %v1198, %v1198
        %v1215 = vmul.f32 %v1199, %v1199
        %v1216 = vmul.f32 %v1200, %v1200
        %v1217 = vmul.f32 %v1201, %v1201
        %v1218 = vmul.f32 %v1202, %v1202
        %v1219 = vmul.f32 %v1203, %v1203
        %v1220 = vmul.f32 %v1204, %v1204
        %v1221 = vmul.f32 %v1205, %v1205
        %v1222 = vmul.f32 %v1206, %v1206
        %v1223 = vmul.f32 %v1207, %v1207
        %v1224 = vmul.f32 %v1208, %v1208
        %v1225 = vmul.f32 %v1209, %v1209
        %vm1226 = vcmask 130048
        %v1227 = vsel %vm1226, %v1210, 0.0
        %1228 = vadd.xlane.f32.xlu0 %v1227
        %v1229 = vpop.xlane.xlu0 %1228
        %v1230 = vsel %vm1226, %v1211, 0.0
        %1231 = vadd.xlane.f32.xlu0 %v1230
        %v1232 = vpop.xlane.xlu0 %1231
        %v1233 = vsel %vm1226, %v1212, 0.0
        %1234 = vadd.xlane.f32.xlu0 %v1233
        %v1235 = vpop.xlane.xlu0 %1234
        %v1236 = vsel %vm1226, %v1213, 0.0
        %1237 = vadd.xlane.f32.xlu0 %v1236
        %v1238 = vpop.xlane.xlu0 %1237
        %v1239 = vsel %vm1226, %v1214, 0.0
        %1240 = vadd.xlane.f32.xlu0 %v1239
        %v1241 = vpop.xlane.xlu0 %1240
        %v1242 = vsel %vm1226, %v1215, 0.0
        %1243 = vadd.xlane.f32.xlu0 %v1242
        %v1244 = vpop.xlane.xlu0 %1243
        %v1245 = vsel %vm1226, %v1216, 0.0
        %1246 = vadd.xlane.f32.xlu0 %v1245
        %v1247 = vpop.xlane.xlu0 %1246
        %v1248 = vsel %vm1226, %v1217, 0.0
        %1249 = vadd.xlane.f32.xlu0 %v1248
        %v1250 = vpop.xlane.xlu0 %1249
        %v1251 = vsel %vm1226, %v1218, 0.0
        %1252 = vadd.xlane.f32.xlu0 %v1251
        %v1253 = vpop.xlane.xlu0 %1252
        %v1254 = vsel %vm1226, %v1219, 0.0
        %1255 = vadd.xlane.f32.xlu0 %v1254
        %v1256 = vpop.xlane.xlu0 %1255
        %v1257 = vsel %vm1226, %v1220, 0.0
        %1258 = vadd.xlane.f32.xlu0 %v1257
        %v1259 = vpop.xlane.xlu0 %1258
        %v1260 = vsel %vm1226, %v1221, 0.0
        %1261 = vadd.xlane.f32.xlu0 %v1260
        %v1262 = vpop.xlane.xlu0 %1261
        %v1263 = vsel %vm1226, %v1222, 0.0
        %1264 = vadd.xlane.f32.xlu0 %v1263
        %v1265 = vpop.xlane.xlu0 %1264
        %v1266 = vsel %vm1226, %v1223, 0.0
        %1267 = vadd.xlane.f32.xlu0 %v1266
        %v1268 = vpop.xlane.xlu0 %1267
        %v1269 = vsel %vm1226, %v1224, 0.0
        %1270 = vadd.xlane.f32.xlu0 %v1269
        %v1271 = vpop.xlane.xlu0 %1270
        %v1272 = vsel %vm1226, %v1225, 0.0
        %1273 = vadd.xlane.f32.xlu0 %v1272
        %v1274 = vpop.xlane.xlu0 %1273
        %v1275 = vrsqrt.pop %v1229
        %v1276 = vmul.f32 %v1275, %v1229
        %v1277 = vmul.f32 %v1276, %v1275
        %v1278 = vmul.f32 0.5, %v1277
        %v1279 = vsub.f32 1.5, %v1278
        %v1280 = vmul.f32 %v1275, %v1279
        %v1281 = vmul.f32 %v1229, %v1280
        %vm1282 = vcmp.eq.f32.partialorder %v1229, inf
        %v1283 = vsel %vm1282, %v1229, %v1281
        %vm1284 = vcmp.eq.f32.partialorder %v1229, 0.0
        %v1285 = vand.u32 %v1229, 2147483648
        %v1286 = vsel %vm1284, %v1285, %v1283
        %v1287 = vrsqrt.pop %v1232
        %v1288 = vmul.f32 %v1287, %v1232
        %v1289 = vmul.f32 %v1288, %v1287
        %v1290 = vmul.f32 0.5, %v1289
        %v1291 = vsub.f32 1.5, %v1290
        %v1292 = vmul.f32 %v1287, %v1291
        %v1293 = vmul.f32 %v1232, %v1292
        %vm1294 = vcmp.eq.f32.partialorder %v1232, inf
        %v1295 = vsel %vm1294, %v1232, %v1293
        %vm1296 = vcmp.eq.f32.partialorder %v1232, 0.0
        %v1297 = vand.u32 %v1232, 2147483648
        %v1298 = vsel %vm1296, %v1297, %v1295
        %v1299 = vrsqrt.pop %v1235
        %v1300 = vmul.f32 %v1299, %v1235
        %v1301 = vmul.f32 %v1300, %v1299
        %v1302 = vmul.f32 0.5, %v1301
        %v1303 = vsub.f32 1.5, %v1302
        %v1304 = vmul.f32 %v1299, %v1303
        %v1305 = vmul.f32 %v1235, %v1304
        %vm1306 = vcmp.eq.f32.partialorder %v1235, inf
        %v1307 = vsel %vm1306, %v1235, %v1305
        %vm1308 = vcmp.eq.f32.partialorder %v1235, 0.0
        %v1309 = vand.u32 %v1235, 2147483648
        %v1310 = vsel %vm1308, %v1309, %v1307
        %v1311 = vrsqrt.pop %v1238
        %v1312 = vmul.f32 %v1311, %v1238
        %v1313 = vmul.f32 %v1312, %v1311
        %v1314 = vmul.f32 0.5, %v1313
        %v1315 = vsub.f32 1.5, %v1314
        %v1316 = vmul.f32 %v1311, %v1315
        %v1317 = vmul.f32 %v1238, %v1316
        %vm1318 = vcmp.eq.f32.partialorder %v1238, inf
        %v1319 = vsel %vm1318, %v1238, %v1317
        %vm1320 = vcmp.eq.f32.partialorder %v1238, 0.0
        %v1321 = vand.u32 %v1238, 2147483648
        %v1322 = vsel %vm1320, %v1321, %v1319
        %v1323 = vrsqrt.pop %v1241
        %v1324 = vmul.f32 %v1323, %v1241
        %v1325 = vmul.f32 %v1324, %v1323
        %v1326 = vmul.f32 0.5, %v1325
        %v1327 = vsub.f32 1.5, %v1326
        %v1328 = vmul.f32 %v1323, %v1327
        %v1329 = vmul.f32 %v1241, %v1328
        %vm1330 = vcmp.eq.f32.partialorder %v1241, inf
        %v1331 = vsel %vm1330, %v1241, %v1329
        %vm1332 = vcmp.eq.f32.partialorder %v1241, 0.0
        %v1333 = vand.u32 %v1241, 2147483648
        %v1334 = vsel %vm1332, %v1333, %v1331
        %v1335 = vrsqrt.pop %v1244
        %v1336 = vmul.f32 %v1335, %v1244
        %v1337 = vmul.f32 %v1336, %v1335
        %v1338 = vmul.f32 0.5, %v1337
        %v1339 = vsub.f32 1.5, %v1338
        %v1340 = vmul.f32 %v1335, %v1339
        %v1341 = vmul.f32 %v1244, %v1340
        %vm1342 = vcmp.eq.f32.partialorder %v1244, inf
        %v1343 = vsel %vm1342, %v1244, %v1341
        %vm1344 = vcmp.eq.f32.partialorder %v1244, 0.0
        %v1345 = vand.u32 %v1244, 2147483648
        %v1346 = vsel %vm1344, %v1345, %v1343
        %v1347 = vrsqrt.pop %v1247
        %v1348 = vmul.f32 %v1347, %v1247
        %v1349 = vmul.f32 %v1348, %v1347
        %v1350 = vmul.f32 0.5, %v1349
        %v1351 = vsub.f32 1.5, %v1350
        %v1352 = vmul.f32 %v1347, %v1351
        %v1353 = vmul.f32 %v1247, %v1352
        %vm1354 = vcmp.eq.f32.partialorder %v1247, inf
        %v1355 = vsel %vm1354, %v1247, %v1353
        %vm1356 = vcmp.eq.f32.partialorder %v1247, 0.0
        %v1357 = vand.u32 %v1247, 2147483648
        %v1358 = vsel %vm1356, %v1357, %v1355
        %v1359 = vrsqrt.pop %v1250
        %v1360 = vmul.f32 %v1359, %v1250
        %v1361 = vmul.f32 %v1360, %v1359
        %v1362 = vmul.f32 0.5, %v1361
        %v1363 = vsub.f32 1.5, %v1362
        %v1364 = vmul.f32 %v1359, %v1363
        %v1365 = vmul.f32 %v1250, %v1364
        %vm1366 = vcmp.eq.f32.partialorder %v1250, inf
        %v1367 = vsel %vm1366, %v1250, %v1365
        %vm1368 = vcmp.eq.f32.partialorder %v1250, 0.0
        %v1369 = vand.u32 %v1250, 2147483648
        %v1370 = vsel %vm1368, %v1369, %v1367
        %v1371 = vrsqrt.pop %v1253
        %v1372 = vmul.f32 %v1371, %v1253
        %v1373 = vmul.f32 %v1372, %v1371
        %v1374 = vmul.f32 0.5, %v1373
        %v1375 = vsub.f32 1.5, %v1374
        %v1376 = vmul.f32 %v1371, %v1375
        %v1377 = vmul.f32 %v1253, %v1376
        %vm1378 = vcmp.eq.f32.partialorder %v1253, inf
        %v1379 = vsel %vm1378, %v1253, %v1377
        %vm1380 = vcmp.eq.f32.partialorder %v1253, 0.0
        %v1381 = vand.u32 %v1253, 2147483648
        %v1382 = vsel %vm1380, %v1381, %v1379
        %v1383 = vrsqrt.pop %v1256
        %v1384 = vmul.f32 %v1383, %v1256
        %v1385 = vmul.f32 %v1384, %v1383
        %v1386 = vmul.f32 0.5, %v1385
        %v1387 = vsub.f32 1.5, %v1386
        %v1388 = vmul.f32 %v1383, %v1387
        %v1389 = vmul.f32 %v1256, %v1388
        %vm1390 = vcmp.eq.f32.partialorder %v1256, inf
        %v1391 = vsel %vm1390, %v1256, %v1389
        %vm1392 = vcmp.eq.f32.partialorder %v1256, 0.0
        %v1393 = vand.u32 %v1256, 2147483648
        %v1394 = vsel %vm1392, %v1393, %v1391
        %v1395 = vrsqrt.pop %v1259
        %v1396 = vmul.f32 %v1395, %v1259
        %v1397 = vmul.f32 %v1396, %v1395
        %v1398 = vmul.f32 0.5, %v1397
        %v1399 = vsub.f32 1.5, %v1398
        %v1400 = vmul.f32 %v1395, %v1399
        %v1401 = vmul.f32 %v1259, %v1400
        %vm1402 = vcmp.eq.f32.partialorder %v1259, inf
        %v1403 = vsel %vm1402, %v1259, %v1401
        %vm1404 = vcmp.eq.f32.partialorder %v1259, 0.0
        %v1405 = vand.u32 %v1259, 2147483648
        %v1406 = vsel %vm1404, %v1405, %v1403
        %v1407 = vrsqrt.pop %v1262
        %v1408 = vmul.f32 %v1407, %v1262
        %v1409 = vmul.f32 %v1408, %v1407
        %v1410 = vmul.f32 0.5, %v1409
        %v1411 = vsub.f32 1.5, %v1410
        %v1412 = vmul.f32 %v1407, %v1411
        %v1413 = vmul.f32 %v1262, %v1412
        %vm1414 = vcmp.eq.f32.partialorder %v1262, inf
        %v1415 = vsel %vm1414, %v1262, %v1413
        %vm1416 = vcmp.eq.f32.partialorder %v1262, 0.0
        %v1417 = vand.u32 %v1262, 2147483648
        %v1418 = vsel %vm1416, %v1417, %v1415
        %v1419 = vrsqrt.pop %v1265
        %v1420 = vmul.f32 %v1419, %v1265
        %v1421 = vmul.f32 %v1420, %v1419
        %v1422 = vmul.f32 0.5, %v1421
        %v1423 = vsub.f32 1.5, %v1422
        %v1424 = vmul.f32 %v1419, %v1423
        %v1425 = vmul.f32 %v1265, %v1424
        %vm1426 = vcmp.eq.f32.partialorder %v1265, inf
        %v1427 = vsel %vm1426, %v1265, %v1425
        %vm1428 = vcmp.eq.f32.partialorder %v1265, 0.0
        %v1429 = vand.u32 %v1265, 2147483648
        %v1430 = vsel %vm1428, %v1429, %v1427
        %v1431 = vrsqrt.pop %v1268
        %v1432 = vmul.f32 %v1431, %v1268
        %v1433 = vmul.f32 %v1432, %v1431
        %v1434 = vmul.f32 0.5, %v1433
        %v1435 = vsub.f32 1.5, %v1434
        %v1436 = vmul.f32 %v1431, %v1435
        %v1437 = vmul.f32 %v1268, %v1436
        %vm1438 = vcmp.eq.f32.partialorder %v1268, inf
        %v1439 = vsel %vm1438, %v1268, %v1437
        %vm1440 = vcmp.eq.f32.partialorder %v1268, 0.0
        %v1441 = vand.u32 %v1268, 2147483648
        %v1442 = vsel %vm1440, %v1441, %v1439
        %v1443 = vrsqrt.pop %v1271
        %v1444 = vmul.f32 %v1443, %v1271
        %v1445 = vmul.f32 %v1444, %v1443
        %v1446 = vmul.f32 0.5, %v1445
        %v1447 = vsub.f32 1.5, %v1446
        %v1448 = vmul.f32 %v1443, %v1447
        %v1449 = vmul.f32 %v1271, %v1448
        %vm1450 = vcmp.eq.f32.partialorder %v1271, inf
        %v1451 = vsel %vm1450, %v1271, %v1449
        %vm1452 = vcmp.eq.f32.partialorder %v1271, 0.0
        %v1453 = vand.u32 %v1271, 2147483648
        %v1454 = vsel %vm1452, %v1453, %v1451
        %v1455 = vrsqrt.pop %v1274
        %v1456 = vmul.f32 %v1455, %v1274
        %v1457 = vmul.f32 %v1456, %v1455
        %v1458 = vmul.f32 0.5, %v1457
        %v1459 = vsub.f32 1.5, %v1458
        %v1460 = vmul.f32 %v1455, %v1459
        %v1461 = vmul.f32 %v1274, %v1460
        %vm1462 = vcmp.eq.f32.partialorder %v1274, inf
        %v1463 = vsel %vm1462, %v1274, %v1461
        %vm1464 = vcmp.eq.f32.partialorder %v1274, 0.0
        %v1465 = vand.u32 %v1274, 2147483648
        %v1466 = vsel %vm1464, %v1465, %v1463
        %v1483 = vlaneseq
        %v1484 = vand.u32 %v1483, 127
        %v1485 = vperm.slane %v1286, %v1484
        %v1486 = vadd.s32 %v1484, 4294967288
        %v1487 = vperm.slane %v1298, %v1486
        %vm1488 = vcmask 130112
        %v1489 = vsel %vm1488, %v1487, %v1485
        %v1490 = vadd.s32 %v1484, 4294967280
        %v1491 = vperm.slane %v1310, %v1490
        %vm1492 = vcmask 195712
        %v1493 = vsel %vm1492, %v1491, %v1489
        %v1494 = vadd.s32 %v1484, 4294967272
        %v1495 = vperm.slane %v1322, %v1494
        %vm1496 = vcmask 261312
        %v1497 = vsel %vm1496, %v1495, %v1493
        %v1498 = vadd.s32 %v1484, 4294967264
        %v1499 = vperm.slane %v1334, %v1498
        %vm1500 = vcmask 326912
        %v1501 = vsel %vm1500, %v1499, %v1497
        %v1502 = vadd.s32 %v1484, 4294967256
        %v1503 = vperm.slane %v1346, %v1502
        %vm1504 = vcmask 392512
        %v1505 = vsel %vm1504, %v1503, %v1501
        %v1506 = vadd.s32 %v1484, 4294967248
        %v1507 = vperm.slane %v1358, %v1506
        %vm1508 = vcmask 458112
        %v1509 = vsel %vm1508, %v1507, %v1505
        %v1510 = vadd.s32 %v1484, 4294967240
        %v1511 = vperm.slane %v1370, %v1510
        %vm1512 = vcmask 523712
        %v1513 = vsel %vm1512, %v1511, %v1509
        %v1514 = vadd.s32 %v1484, 4294967232
        %v1515 = vperm.slane %v1382, %v1514
        %vm1516 = vcmask 589312
        %v1517 = vsel %vm1516, %v1515, %v1513
        %v1518 = vadd.s32 %v1484, 4294967224
        %v1519 = vperm.slane %v1394, %v1518
        %vm1520 = vcmask 654912
        %v1521 = vsel %vm1520, %v1519, %v1517
        %v1522 = vadd.s32 %v1484, 4294967216
        %v1523 = vperm.slane %v1406, %v1522
        %vm1524 = vcmask 720512
        %v1525 = vsel %vm1524, %v1523, %v1521
        %v1526 = vadd.s32 %v1484, 4294967208
        %v1527 = vperm.slane %v1418, %v1526
        %vm1528 = vcmask 786112
        %v1529 = vsel %vm1528, %v1527, %v1525
        %v1530 = vadd.s32 %v1484, 4294967200
        %v1531 = vperm.slane %v1430, %v1530
        %vm1532 = vcmask 851712
        %v1533 = vsel %vm1532, %v1531, %v1529
        %v1534 = vadd.s32 %v1484, 4294967192
        %v1535 = vperm.slane %v1442, %v1534
        %vm1536 = vcmask 917312
        %v1537 = vsel %vm1536, %v1535, %v1533
        %v1538 = vadd.s32 %v1484, 4294967184
        %v1539 = vperm.slane %v1454, %v1538
        %vm1540 = vcmask 982912
        %v1541 = vsel %vm1540, %v1539, %v1537
        %v1542 = vadd.s32 %v1484, 4294967176
        %v1543 = vperm.slane %v1466, %v1542
        %vm1544 = vcmask 1048512
        %v1545 = vsel %vm1544, %v1543, %v1541
        %1547 = vst [vmem:[%s435] sm:$0x1] %v1545
        %s1548 = sand.u32 %s181, 1
        %s1549 = scalar_lea.sflag [#allocation4], %s1548
        %s1550 = sand.u32 %s181, 1
        %s1551 = scalar_lea.vmem [#allocation3], %s1550
        // Predicated region
        $region87: #{tpu_custom_call.1} parent=81 // pred_check
          %p1552 = pneg %p191
        $region88: #{tpu_custom_call.1} parent=81 // pred_check_branch
          %1554 = sbr.rel (%p1552) target = $region90
        $region89: #{tpu_custom_call.1} parent=81 // pred_region
          %1556 = vsyncadd %s1549, 0
          %s1557 = scalar_lea.hbm %s7, %s21
          %s1559 = sshll.u32 %s1551, 4
          %s1560 = int_to_ptr.vmem [resolvable:$true] %s1559
          %s1561 = sshll.u32 %s1557, 4
          %s1562 = int_to_ptr.hbm [resolvable:$true] %s1561
          %1564 = dma.vmem_to_hbm [thread:$0]  %s1560, 16, %s1562, %s1549
        $region90: #{tpu_custom_call.1} parent=81 // pred_fallthru
          _
      $region82: #{tpu_custom_call.1} parent=5 // pred_fallthru
        _
      %p1565 = scmp.le.s32.totalorder 2, %s16
      // Predicated region
      $region91: #{tpu_custom_call.1} parent=5 // pred_check
        %p1566 = pneg %p1565
      $region92: #{tpu_custom_call.1} parent=5 // pred_check_branch
        %1568 = sbr.rel (%p1566) target = $region94
      $region93: #{tpu_custom_call.1} parent=5 // pred_region
        %s1569 = ssub.s32 %s16, 2
        // Predicated region
        $region95: #{tpu_custom_call.1} parent=93 // pred_check
          %p1570 = pneg %p197
        $region96: #{tpu_custom_call.1} parent=93 // pred_check_branch
          %1572 = sbr.rel (%p1570) target = $region98
        $region97: #{tpu_custom_call.1} parent=93 // pred_region
          %s1573 = sand.u32 %s182, 1
          %s1574 = scalar_lea.sflag [#allocation4], %s1573
          %s1575 = sand.u32 %s182, 1
          %s1576 = scalar_lea.vmem [#allocation3], %s1575
          %1578 = dma.done %s1574, 16
        $region98: #{tpu_custom_call.1} parent=93 // pred_fallthru
          _
      $region94: #{tpu_custom_call.1} parent=5 // pred_fallthru
        _
    $region6: #{tpu_custom_call.1} parent=1 // loop_footer
      %s20 = sadd.s32 1, %s16
    $region7: #{tpu_custom_call.1} parent=1 // loop_footer_branch
      %15 = sbr.rel target = $region3
    $region8: #{tpu_custom_call.1} parent=1 // loop_exit
      _
    %1579 = vsyncpa [#allocation4], 1
    %s1580 = scalar_lea.sflag [#allocation4], 1
    %1581 = vsyncpa %s1580, 1

</llo_original>
